<compile_context>
chip_gen: v7x
topology: tpu7x:2x2x1
jax: 0.10.0
libtpu: 0.0.40
codegen_flags: <defaults>
</compile_context>

<pallas_src>
import functools

import jax
import jax.numpy as jnp
from jax.experimental import pallas as pl
from jax.experimental.pallas import tpu as pltpu


_VMEM_LIMIT_BYTES = 32 * 1024 * 1024     # explicit: safe on v5e/v6e/v7x
_TILE_VMEM_BUDGET = 4 << 20              # per-buffer working-set budget


def _compiler_params():
    return pltpu.CompilerParams(
        dimension_semantics=("parallel", "parallel"),
        vmem_limit_bytes=_VMEM_LIMIT_BYTES)


def _pick_row_tile(m, row_bytes):
    """Largest multiple of 8 dividing m, bounded by a VMEM budget (<=512)."""
    if m % 8 != 0:
        return m                       # full extent (tiny models only)
    cap = min(512, m, max(8, _TILE_VMEM_BUDGET // max(row_bytes, 1)))
    cap = (cap // 8) * 8
    for t in range(cap, 7, -8):
        if m % t == 0:
            return t
    return m


def _pick_lane_tile(m, col_bytes):
    """Largest multiple of 128 dividing m, bounded by a VMEM budget (<=1024)."""
    if m % 128 != 0:
        return m                       # full extent
    cap = min(1024, m, max(128, _TILE_VMEM_BUDGET // max(col_bytes, 1)))
    cap = (cap // 128) * 128
    for t in range(cap, 127, -128):
        if m % t == 0:
            return t
    return m


# ---------------------------------------------------------------------------
# Pallas kernels
# ---------------------------------------------------------------------------

def _proj_expand_kernel(x_ref, wp_ref, bp_ref, we_ref, o_ref):
    # h = x @ Wproj_d + bproj_d ; y = h @ Wexpand_d   (bf16 MXU, f32 accum)
    x = x_ref[...].astype(jnp.bfloat16)
    h = jnp.dot(x, wp_ref[0].astype(jnp.bfloat16),
                preferred_element_type=jnp.float32) + bp_ref[0]
    o_ref[0] = jnp.dot(h.astype(jnp.bfloat16), we_ref[0].astype(jnp.bfloat16),
                       preferred_element_type=jnp.float32)


def _concat_expand_kernel(a_ref, b_ref, wa_ref, wb_ref, bias_ref, we_ref,
                          o_ref):
    # concat([a, b]) @ W + bias  ==  a @ Wa + b @ Wb + bias ; then expand.
    a = a_ref[0].astype(jnp.bfloat16)
    b = b_ref[0].astype(jnp.bfloat16)
    h = (jnp.dot(a, wa_ref[0].astype(jnp.bfloat16),
                 preferred_element_type=jnp.float32)
         + jnp.dot(b, wb_ref[0].astype(jnp.bfloat16),
                   preferred_element_type=jnp.float32)
         + bias_ref[0])
    o_ref[0] = jnp.dot(h.astype(jnp.bfloat16), we_ref[0].astype(jnp.bfloat16),
                       preferred_element_type=jnp.float32)


def _final_fused_kernel(aT_ref, bT_ref, waT_ref, wbT_ref, bias_ref,
                        g_ref, beta_ref, wcT_ref, bc_ref, o_ref, *, eps):
    # Transposed orientation: features on sublanes, pixels on lanes.
    #   hT = Wa^T aT + Wb^T bT + b   (== (concat([a,b]) @ W + b)^T)
    #   LayerNorm over features (axis 0), then ConvTranspose matmul.
    aT = aT_ref[0].astype(jnp.bfloat16)           # (C, tn)
    bT = bT_ref[0].astype(jnp.bfloat16)           # (C, tn)
    hT = (jnp.dot(waT_ref[0].astype(jnp.bfloat16), aT,
                  preferred_element_type=jnp.float32)
          + jnp.dot(wbT_ref[0].astype(jnp.bfloat16), bT,
                    preferred_element_type=jnp.float32)
          + bias_ref[0])                          # (C, tn)
    mean = jnp.mean(hT, axis=0, keepdims=True)
    var = jnp.mean(jnp.square(hT - mean), axis=0, keepdims=True)
    xn = (hT - mean) * jax.lax.rsqrt(var + eps)
    xn = xn * g_ref[0] + beta_ref[0]              # (C, tn)
    o_ref[0] = (jnp.dot(wcT_ref[0].astype(jnp.bfloat16),
                        xn.astype(jnp.bfloat16),
                        preferred_element_type=jnp.float32)
                + bc_ref[0])                      # (Cmax*P*P, tn), lane-dense


# ---------------------------------------------------------------------------
# pallas_call wrappers
# ---------------------------------------------------------------------------

def proj_expand_pallas(x2d, wp, bp, we):
    """Fused proj + per-decoder split + PatchExpanding linear.

    x2d: (M, K); wp: (D, K, S); bp: (D, 1, S); we: (D, S, 2S) -> (D, M, 2S).
    """
    M, K = x2d.shape
    D, _, S = wp.shape
    Ne = we.shape[2]
    tm = _pick_row_tile(M, (K + S + Ne) * 4)
    return pl.pallas_call(
        _proj_expand_kernel,
        out_shape=jax.ShapeDtypeStruct((D, M, Ne), jnp.float32),
        grid=(D, M // tm),
        in_specs=[pl.BlockSpec((tm, K), lambda d, i: (i, 0)),
                  pl.BlockSpec((1, K, S), lambda d, i: (d, 0, 0)),
                  pl.BlockSpec((1, 1, S), lambda d, i: (d, 0, 0)),
                  pl.BlockSpec((1, S, Ne), lambda d, i: (d, 0, 0))],
        out_specs=pl.BlockSpec((1, tm, Ne), lambda d, i: (d, i, 0)),
        compiler_params=_compiler_params(),
    )(x2d, wp, bp, we)


def concat_expand_pallas(a, b, wa, wb, bias, we):
    """Fused concat_proj + PatchExpanding linear for middle decoder stages.

    a, b: (D, M, C); wa, wb: (D, C, C); bias: (D, 1, C); we: (D, C, 2C).
    """
    D, M, C = a.shape
    Ne = we.shape[2]
    tm = _pick_row_tile(M, (3 * C + Ne) * 4)
    return pl.pallas_call(
        _concat_expand_kernel,
        out_shape=jax.ShapeDtypeStruct((D, M, Ne), jnp.float32),
        grid=(D, M // tm),
        in_specs=[pl.BlockSpec((1, tm, C), lambda d, i: (d, i, 0)),
                  pl.BlockSpec((1, tm, C), lambda d, i: (d, i, 0)),
                  pl.BlockSpec((1, C, C), lambda d, i: (d, 0, 0)),
                  pl.BlockSpec((1, C, C), lambda d, i: (d, 0, 0)),
                  pl.BlockSpec((1, 1, C), lambda d, i: (d, 0, 0)),
                  pl.BlockSpec((1, C, Ne), lambda d, i: (d, 0, 0))],
        out_specs=pl.BlockSpec((1, tm, Ne), lambda d, i: (d, i, 0)),
        compiler_params=_compiler_params(),
    )(a, b, wa, wb, bias, we)


def final_fused_pallas(aT, bT, waT, wbT, bias, gT, betaT, wcT, bcT, eps):
    """Fused concat_proj + LayerNorm + folded ConvTranspose2d (transposed).

    aT, bT: (D, C, M) channels-first; weights pre-transposed/stacked/padded.
    Returns (D, Cmax*P*P, M) — pixels on the lane axis (lane-dense stores).
    """
    D, C, M = aT.shape
    CPP = wcT.shape[1]
    tn = _pick_lane_tile(M, (3 * C + CPP) * 4)
    return pl.pallas_call(
        functools.partial(_final_fused_kernel, eps=eps),
        out_shape=jax.ShapeDtypeStruct((D, CPP, M), jnp.float32),
        grid=(D, M // tn),
        in_specs=[pl.BlockSpec((1, C, tn), lambda d, j: (d, 0, j)),
                  pl.BlockSpec((1, C, tn), lambda d, j: (d, 0, j)),
                  pl.BlockSpec((1, C, C), lambda d, j: (d, 0, 0)),
                  pl.BlockSpec((1, C, C), lambda d, j: (d, 0, 0)),
                  pl.BlockSpec((1, C, 1), lambda d, j: (d, 0, 0)),
                  pl.BlockSpec((1, C, 1), lambda d, j: (d, 0, 0)),
                  pl.BlockSpec((1, C, 1), lambda d, j: (d, 0, 0)),
                  pl.BlockSpec((1, CPP, C), lambda d, j: (d, 0, 0)),
                  pl.BlockSpec((1, CPP, 1), lambda d, j: (d, 0, 0))],
        out_specs=pl.BlockSpec((1, CPP, tn), lambda d, j: (d, 0, j)),
        compiler_params=_compiler_params(),
    )(aT, bT, waT, wbT, bias, gT, betaT, wcT, bcT)


# ---------------------------------------------------------------------------
# XLA glue: pixel shuffles (PatchExpanding rearrange)
# ---------------------------------------------------------------------------

def pixel_shuffle(y, N, H, W):
    """(D, N*H*W, 4*Cn) -> (D, N*2H*2W, Cn)  (channels-last, NHWC row order)."""
    Dn, _, C4 = y.shape
    Cn = C4 // 4
    y = y.reshape(Dn, N, H, W, 2, 2, Cn).transpose(0, 1, 2, 4, 3, 5, 6)
    return y.reshape(Dn, N * 2 * H * 2 * W, Cn)


def pixel_shuffle_to_cfirst(y, N, H, W):
    """Pixel-shuffle fused with the channels-first relayout the lane-dense
    final kernel consumes: (D, N*H*W, 4*Cn) -> (D, Cn, N*2H*2W)."""
    Dn, _, C4 = y.shape
    Cn = C4 // 4
    y = y.reshape(Dn, N, H, W, 2, 2, Cn).transpose(0, 6, 1, 2, 4, 3, 5)
    return y.reshape(Dn, Cn, N * 2 * H * 2 * W)


# ---------------------------------------------------------------------------
# Model config / parameters (logical layout mirrors the PyTorch module)
# ---------------------------------------------------------------------------

class Config:
    enc_depths = (2, 2)
    enc_heads = (2, 4)
    embed_dim = 16
    window_size = 4
    patch_size = 2
    drop_path_rate = 0.1
    layer_norm_eps = 1e-5
    max_t = 4
    out_chans = (3, 2)
    in_chans = (5, 4)        # only len(in_chans) matters for the big proj
    lg_hidden_dim = 32


def _dense_params(key, fan_in, fan_out):
    kw, kb = jax.random.split(key)
    return {"w": jax.random.normal(kw, (fan_in, fan_out), jnp.float32) * 0.02,
            "b": jax.random.normal(kb, (fan_out,), jnp.float32) * 0.02}


def init_params(key, cfg):
    ns = len(cfg.enc_depths)
    num_dec = len(cfg.out_chans)
    params = {}
    key, k = jax.random.split(key)
    params["proj"] = _dense_params(
        k, cfg.lg_hidden_dim,
        cfg.embed_dim * 2 ** (ns - 1) * len(cfg.in_chans))
    decoders = []
    for d in range(num_dec):
        dec = {"concat_proj": [], "upsample": {}}
        for i_stage in range(ns - 1, -1, -1):
            dim = cfg.embed_dim * 2 ** i_stage
            if i_stage > 0:
                key, k = jax.random.split(key)
                # TODO(synk): PatchExpanding's source is not provided; the
                # standard Swin-Unet definition (Linear(dim, 2*dim) +
                # pixel-shuffle) is used so the documented shape flow holds.
                dec["upsample"][i_stage] = (
                    jax.random.normal(k, (dim, 2 * dim), jnp.float32) * 0.02)
            if i_stage < ns - 1:
                key, k = jax.random.split(key)
                dec["concat_proj"].append(_dense_params(k, 2 * dim, dim))
        dec["norm_gamma"] = jnp.ones((cfg.embed_dim,), jnp.float32)
        dec["norm_beta"] = jnp.zeros((cfg.embed_dim,), jnp.float32)
        key, kw, kb = jax.random.split(key, 3)
        P = cfg.patch_size
        dec["final_w"] = jax.random.normal(
            kw, (cfg.embed_dim, cfg.out_chans[d], P, P), jnp.float32) * 0.02
        dec["final_b"] = jax.random.normal(
            kb, (cfg.out_chans[d],), jnp.float32) * 0.02
        decoders.append(dec)
    params["decoders"] = decoders
    return params


def pack_params(params, cfg):
    """Stack / transpose / pad the logical parameters into the kernel layout
    (done once, outside the hot path)."""
    ns = len(cfg.enc_depths)
    D = len(cfg.out_chans)
    P = cfg.patch_size
    E = cfg.embed_dim
    split = E * 2 ** (ns - 1)
    decs = params["decoders"]
    packed = {}

    # K1: proj (per-decoder column slice) + top-level PatchExpanding weight.
    wp = params["proj"]["w"]
    bp = params["proj"]["b"]
    packed["wp"] = jnp.stack(
        [wp[:, d * split:(d + 1) * split] for d in range(D)], 0)
    packed["bp"] = jnp.stack(
        [bp[d * split:(d + 1) * split] for d in range(D)], 0).reshape(D, 1, split)
    packed["we_top"] = jnp.stack(
        [decs[d]["upsample"][ns - 1] for d in range(D)], 0)

    # Middle stages (only present when ns > 2).
    packed["mid"] = []
    for i in range(1, ns - 1):
        i_stage = ns - 1 - i
        dim = E * 2 ** i_stage
        cp = [decs[d]["concat_proj"][i - 1] for d in range(D)]
        packed["mid"].append({
            "wa": jnp.stack([p["w"][:dim] for p in cp], 0),
            "wb": jnp.stack([p["w"][dim:] for p in cp], 0),
            "b": jnp.stack([p["b"] for p in cp], 0).reshape(D, 1, dim),
            "we": jnp.stack([decs[d]["upsample"][i_stage] for d in range(D)], 0),
        })

    # Final stage: concat_proj (transposed split), LN params, folded convT
    # weight transposed and padded to the max Cout so both decoders share one
    # pallas_call.
    dim = E
    cmax = max(cfg.out_chans) * P * P
    cp = [decs[d]["concat_proj"][ns - 2] for d in range(D)]
    wcs, bcs = [], []
    for d in range(D):
        cpp = cfg.out_chans[d] * P * P
        w = decs[d]["final_w"].reshape(dim, cpp).T           # (cpp, dim)
        b = jnp.repeat(decs[d]["final_b"], P * P).reshape(cpp, 1)
        wcs.append(jnp.pad(w, ((0, cmax - cpp), (0, 0))))
        bcs.append(jnp.pad(b, ((0, cmax - cpp), (0, 0))))
    packed["final"] = {
        "waT": jnp.stack([p["w"][:dim].T for p in cp], 0),
        "wbT": jnp.stack([p["w"][dim:].T for p in cp], 0),
        "b": jnp.stack([p["b"] for p in cp], 0).reshape(D, dim, 1),
        "gT": jnp.stack([decs[d]["norm_gamma"] for d in range(D)], 0
                        ).reshape(D, dim, 1),
        "bT": jnp.stack([decs[d]["norm_beta"] for d in range(D)], 0
                        ).reshape(D, dim, 1),
        "wcT": jnp.stack(wcs, 0),
        "bcT": jnp.stack(bcs, 0),
    }
    return packed


# ---------------------------------------------------------------------------
# Forward pass
# ---------------------------------------------------------------------------

def ocean_decoders_forward(cfg, packed, x, lead_time, all_enc_x,
                           all_land_mask_pad, all_land_mask_pad_shifted):
    # TODO(synk): SwinDecoderStage's windowed-attention blocks (and the
    # lead_time / land-mask conditioning and drop_path they consume) are not
    # defined in the provided source; each stage is reduced to its upsample.
    ns = len(cfg.enc_depths)          # requires ns >= 2 (as in the config)
    D = len(cfg.out_chans)
    P = cfg.patch_size
    eps = cfg.layer_norm_eps
    N, H, W, _ = x.shape

    # Stage i=0 (i_stage = ns-1): fused proj -> split -> PatchExpanding linear.
    y = proj_expand_pallas(x.reshape(N * H * W, x.shape[-1]),
                           packed["wp"], packed["bp"], packed["we_top"])
    if ns == 2:
        xcur = pixel_shuffle_to_cfirst(y, N, H, W)      # (D, C, M)
    else:
        xcur = pixel_shuffle(y, N, H, W)                # (D, M, C)
    H, W = 2 * H, 2 * W
    C = cfg.embed_dim * 2 ** (ns - 2)

    # Middle stages (ns > 2): fused concat_proj + PatchExpanding linear.
    for i in range(1, ns - 1):
        i_stage = ns - 1 - i
        skip = jnp.stack([all_enc_x[d][i_stage] for d in range(D)], 0)
        skip = skip.reshape(D, N * H * W, C)
        mp = packed["mid"][i - 1]
        y = concat_expand_pallas(xcur, skip, mp["wa"], mp["wb"], mp["b"],
                                 mp["we"])
        if i == ns - 2:                                  # feeds the final stage
            xcur = pixel_shuffle_to_cfirst(y, N, H, W)
        else:
            xcur = pixel_shuffle(y, N, H, W)
        H, W = 2 * H, 2 * W
        C //= 2

    # Final stage (i_stage = 0): fused concat_proj + LayerNorm + ConvTranspose,
    # channels-first so the output store is lane dense.
    skipT = jnp.stack([all_enc_x[d][0] for d in range(D)], 0)
    skipT = skipT.reshape(D, N * H * W, C).transpose(0, 2, 1)   # (D, C, M)
    fp = packed["final"]
    outT = final_fused_pallas(xcur, skipT, fp["waT"], fp["wbT"], fp["b"],
                              fp["gT"], fp["bT"], fp["wcT"], fp["bcT"], eps)
    # outT: (D, Cmax*P*P, N*H*W) with columns ordered (n, h, w).

    outs = []
    for d in range(D):
        Cout = cfg.out_chans[d]
        yT = outT[d, :Cout * P * P, :].reshape(Cout, P, P, N, H, W)
        outs.append(yT.transpose(3, 0, 4, 1, 5, 2)
                    .reshape(N, Cout, H * P, W * P))
    return jnp.concatenate(outs, axis=1)                 # NCHW, like PyTorch


# ---------------------------------------------------------------------------
# Demo
# ---------------------------------------------------------------------------

if __name__ == "__main__":
    cfg = Config()
    ns = len(cfg.enc_depths)
    N, H0, W0 = 2, 4, 4

    params = init_params(jax.random.PRNGKey(42), cfg)
    packed = pack_params(params, cfg)

    key = jax.random.PRNGKey(0)
    k_x, k_enc = jax.random.split(key)
    x = jax.random.normal(k_x, (N, H0, W0, cfg.lg_hidden_dim), jnp.float32)
    lead_time = jnp.zeros((N,), jnp.int32)

    all_enc_x = []
    for d in range(len(cfg.out_chans)):
        enc_list = []
        for j in range(ns):
            k_enc, k = jax.random.split(k_enc)
            Hj = H0 * 2 ** (ns - 1 - j)
            Wj = W0 * 2 ** (ns - 1 - j)
            Cj = cfg.embed_dim * 2 ** j
            enc_list.append(jax.random.normal(k, (N, Hj, Wj, Cj), jnp.float32))
        all_enc_x.append(enc_list)

    # Land masks are only consumed inside the (unprovided) SwinDecoderStage
    # attention; pass per-stage placeholders.
    all_land_mask_pad = [
        jnp.zeros((N, H0 * 2 ** (ns - 1 - j), W0 * 2 ** (ns - 1 - j)),
                  jnp.float32) for j in range(ns)]
    all_land_mask_pad_shifted = list(all_land_mask_pad)

    fwd = jax.jit(functools.partial(ocean_decoders_forward, cfg))
    out = fwd(packed, x, lead_time, all_enc_x, all_land_mask_pad,
              all_land_mask_pad_shifted)
    out = jax.block_until_ready(out)

    expected = (N, sum(cfg.out_chans),
                H0 * 2 ** (ns - 1) * cfg.patch_size,
                W0 * 2 ** (ns - 1) * cfg.patch_size)
    assert out.shape == expected, (out.shape, expected)
    assert bool(jnp.all(jnp.isfinite(out)))
    print("KERNEL_OK")
</pallas_src>

<mosaic_0001>
module attributes {stable_mosaic.version = 11 : i64} {
  func.func @_proj_expand_kernel(%arg0: i32, %arg1: i32, %arg2: memref<32x32xf32, #tpu.memory_space<vmem>>, %arg3: memref<1x32x32xf32, #tpu.memory_space<vmem>>, %arg4: memref<1x1x32xf32, #tpu.memory_space<vmem>>, %arg5: memref<1x32x64xf32, #tpu.memory_space<vmem>>, %arg6: memref<1x32x64xf32, #tpu.memory_space<vmem>>) attributes {dimension_semantics = [#tpu.dimension_semantics<parallel>, #tpu.dimension_semantics<parallel>], iteration_bounds = array<i64: 2, 1>, scalar_prefetch = 0 : i64, scratch_operands = 0 : i64, tpu.core_type = #tpu.core_type<tc>, window_params = [{transform_indices = @transform_0, window_bounds = array<i64: 32, 32>}, {transform_indices = @transform_1, window_bounds = array<i64: 1, 32, 32>}, {transform_indices = @transform_2, window_bounds = array<i64: 1, 1, 32>}, {transform_indices = @transform_3, window_bounds = array<i64: 1, 32, 64>}, {transform_indices = @transform_4, window_bounds = array<i64: 1, 32, 64>}]} {
    %c0 = arith.constant 0 : index
    %c0_0 = arith.constant 0 : index
    %0 = vector.load %arg2[%c0, %c0_0] : memref<32x32xf32, #tpu.memory_space<vmem>>, vector<32x32xf32>
    %1 = arith.truncf %0 : vector<32x32xf32> to vector<32x32xbf16>
    %c0_1 = arith.constant 0 : index
    %c0_2 = arith.constant 0 : index
    %c0_3 = arith.constant 0 : index
    %2 = vector.load %arg3[%c0_1, %c0_2, %c0_3] : memref<1x32x32xf32, #tpu.memory_space<vmem>>, vector<1x32x32xf32>
    %3 = vector.shape_cast %2 : vector<1x32x32xf32> to vector<32x32xf32>
    %4 = arith.truncf %3 : vector<32x32xf32> to vector<32x32xbf16>
    %cst = arith.constant dense<0.000000e+00> : vector<32x32xf32>
    %5 = tpu.matmul %1, %4, %cst {dimension_numbers = #tpu.dot_dimension_numbers<[1], [0], [0], [1], [0, 0, 1, 1], [], []>} : vector<32x32xbf16>, vector<32x32xbf16>, vector<32x32xf32> -> vector<32x32xf32>
    %c0_4 = arith.constant 0 : index
    %c0_5 = arith.constant 0 : index
    %c0_6 = arith.constant 0 : index
    %6 = vector.load %arg4[%c0_4, %c0_5, %c0_6] : memref<1x1x32xf32, #tpu.memory_space<vmem>>, vector<1x1x32xf32>
    %7 = vector.shape_cast %6 : vector<1x1x32xf32> to vector<1x32xf32>
    %8 = vector.broadcast %7 : vector<1x32xf32> to vector<32x32xf32>
    %9 = arith.addf %5, %8 : vector<32x32xf32>
    %10 = arith.truncf %9 : vector<32x32xf32> to vector<32x32xbf16>
    %c0_7 = arith.constant 0 : index
    %c0_8 = arith.constant 0 : index
    %c0_9 = arith.constant 0 : index
    %11 = vector.load %arg5[%c0_7, %c0_8, %c0_9] : memref<1x32x64xf32, #tpu.memory_space<vmem>>, vector<1x32x64xf32>
    %12 = vector.shape_cast %11 : vector<1x32x64xf32> to vector<32x64xf32>
    %13 = arith.truncf %12 : vector<32x64xf32> to vector<32x64xbf16>
    %cst_10 = arith.constant dense<0.000000e+00> : vector<32x64xf32>
    %14 = tpu.matmul %10, %13, %cst_10 {dimension_numbers = #tpu.dot_dimension_numbers<[1], [0], [0], [1], [0, 0, 1, 1], [], []>} : vector<32x32xbf16>, vector<32x64xbf16>, vector<32x64xf32> -> vector<32x64xf32>
    %c0_11 = arith.constant 0 : index
    %c0_12 = arith.constant 0 : index
    %c0_13 = arith.constant 0 : index
    %15 = vector.load %arg6[%c0_11, %c0_12, %c0_13] : memref<1x32x64xf32, #tpu.memory_space<vmem>>, vector<1x32x64xf32>
    %16 = vector.shape_cast %15 : vector<1x32x64xf32> to vector<32x64xf32>
    %17 = vector.shape_cast %14 : vector<32x64xf32> to vector<1x32x64xf32>
    tpu.vector_store %arg6[%c0_11, %c0_12, %c0_13], %17 {strides = array<i32>} : memref<1x32x64xf32, #tpu.memory_space<vmem>>, vector<1x32x64xf32>,
    return
  }
  func.func @transform_0(%arg0: i32, %arg1: i32) -> (i32, i32) {
    %c0_i32 = arith.constant 0 : i32
    %c0_i32_0 = arith.constant 0 : i32
    return %arg1, %c0_i32 : i32, i32
  }
  func.func @transform_1(%arg0: i32, %arg1: i32) -> (i32, i32, i32) {
    %c0_i32 = arith.constant 0 : i32
    %c0_i32_0 = arith.constant 0 : i32
    %c0_i32_1 = arith.constant 0 : i32
    return %arg0, %c0_i32, %c0_i32_0 : i32, i32, i32
  }
  func.func @transform_2(%arg0: i32, %arg1: i32) -> (i32, i32, i32) {
    %c0_i32 = arith.constant 0 : i32
    %c0_i32_0 = arith.constant 0 : i32
    %c0_i32_1 = arith.constant 0 : i32
    return %arg0, %c0_i32, %c0_i32_0 : i32, i32, i32
  }
  func.func @transform_3(%arg0: i32, %arg1: i32) -> (i32, i32, i32) {
    %c0_i32 = arith.constant 0 : i32
    %c0_i32_0 = arith.constant 0 : i32
    %c0_i32_1 = arith.constant 0 : i32
    return %arg0, %c0_i32, %c0_i32_0 : i32, i32, i32
  }
  func.func @transform_4(%arg0: i32, %arg1: i32) -> (i32, i32, i32) {
    %c0_i32 = arith.constant 0 : i32
    %c0_i32_0 = arith.constant 0 : i32
    return %arg0, %arg1, %c0_i32 : i32, i32, i32
  }
}

module attributes {stable_mosaic.version = 11 : i64} {
  func.func @_final_fused_kernel(%arg0: i32, %arg1: i32, %arg2: memref<1x16x128xf32, #tpu.memory_space<vmem>>, %arg3: memref<1x16x128xf32, #tpu.memory_space<vmem>>, %arg4: memref<1x16x16xf32, #tpu.memory_space<vmem>>, %arg5: memref<1x16x16xf32, #tpu.memory_space<vmem>>, %arg6: memref<1x16x1xf32, #tpu.memory_space<vmem>>, %arg7: memref<1x16x1xf32, #tpu.memory_space<vmem>>, %arg8: memref<1x16x1xf32, #tpu.memory_space<vmem>>, %arg9: memref<1x12x16xf32, #tpu.memory_space<vmem>>, %arg10: memref<1x12x1xf32, #tpu.memory_space<vmem>>, %arg11: memref<1x12x128xf32, #tpu.memory_space<vmem>>) attributes {dimension_semantics = [#tpu.dimension_semantics<parallel>, #tpu.dimension_semantics<parallel>], iteration_bounds = array<i64: 2, 1>, scalar_prefetch = 0 : i64, scratch_operands = 0 : i64, tpu.core_type = #tpu.core_type<tc>, window_params = [{transform_indices = @transform_0, window_bounds = array<i64: 1, 16, 128>}, {transform_indices = @transform_1, window_bounds = array<i64: 1, 16, 128>}, {transform_indices = @transform_2, window_bounds = array<i64: 1, 16, 16>}, {transform_indices = @transform_3, window_bounds = array<i64: 1, 16, 16>}, {transform_indices = @transform_4, window_bounds = array<i64: 1, 16, 1>}, {transform_indices = @transform_5, window_bounds = array<i64: 1, 16, 1>}, {transform_indices = @transform_6, window_bounds = array<i64: 1, 16, 1>}, {transform_indices = @transform_7, window_bounds = array<i64: 1, 12, 16>}, {transform_indices = @transform_8, window_bounds = array<i64: 1, 12, 1>}, {transform_indices = @transform_9, window_bounds = array<i64: 1, 12, 128>}]} {
    %c0 = arith.constant 0 : index
    %c0_0 = arith.constant 0 : index
    %c0_1 = arith.constant 0 : index
    %0 = vector.load %arg2[%c0, %c0_0, %c0_1] : memref<1x16x128xf32, #tpu.memory_space<vmem>>, vector<1x16x128xf32>
    %1 = vector.shape_cast %0 : vector<1x16x128xf32> to vector<16x128xf32>
    %2 = arith.truncf %1 : vector<16x128xf32> to vector<16x128xbf16>
    %c0_2 = arith.constant 0 : index
    %c0_3 = arith.constant 0 : index
    %c0_4 = arith.constant 0 : index
    %3 = vector.load %arg3[%c0_2, %c0_3, %c0_4] : memref<1x16x128xf32, #tpu.memory_space<vmem>>, vector<1x16x128xf32>
    %4 = vector.shape_cast %3 : vector<1x16x128xf32> to vector<16x128xf32>
    %5 = arith.truncf %4 : vector<16x128xf32> to vector<16x128xbf16>
    %c0_5 = arith.constant 0 : index
    %c0_6 = arith.constant 0 : index
    %c0_7 = arith.constant 0 : index
    %6 = vector.load %arg4[%c0_5, %c0_6, %c0_7] : memref<1x16x16xf32, #tpu.memory_space<vmem>>, vector<1x16x16xf32>
    %7 = vector.shape_cast %6 : vector<1x16x16xf32> to vector<16x16xf32>
    %8 = arith.truncf %7 : vector<16x16xf32> to vector<16x16xbf16>
    %cst = arith.constant dense<0.000000e+00> : vector<16x128xf32>
    %9 = tpu.matmul %8, %2, %cst {dimension_numbers = #tpu.dot_dimension_numbers<[1], [0], [0], [1], [0, 0, 1, 1], [], []>} : vector<16x16xbf16>, vector<16x128xbf16>, vector<16x128xf32> -> vector<16x128xf32>
    %c0_8 = arith.constant 0 : index
    %c0_9 = arith.constant 0 : index
    %c0_10 = arith.constant 0 : index
    %10 = vector.load %arg5[%c0_8, %c0_9, %c0_10] : memref<1x16x16xf32, #tpu.memory_space<vmem>>, vector<1x16x16xf32>
    %11 = vector.shape_cast %10 : vector<1x16x16xf32> to vector<16x16xf32>
    %12 = arith.truncf %11 : vector<16x16xf32> to vector<16x16xbf16>
    %cst_11 = arith.constant dense<0.000000e+00> : vector<16x128xf32>
    %13 = tpu.matmul %12, %5, %cst_11 {dimension_numbers = #tpu.dot_dimension_numbers<[1], [0], [0], [1], [0, 0, 1, 1], [], []>} : vector<16x16xbf16>, vector<16x128xbf16>, vector<16x128xf32> -> vector<16x128xf32>
    %14 = arith.addf %9, %13 : vector<16x128xf32>
    %c0_12 = arith.constant 0 : index
    %c0_13 = arith.constant 0 : index
    %c0_14 = arith.constant 0 : index
    %15 = vector.load %arg6[%c0_12, %c0_13, %c0_14] : memref<1x16x1xf32, #tpu.memory_space<vmem>>, vector<1x16x1xf32>
    %16 = vector.shape_cast %15 : vector<1x16x1xf32> to vector<16x1xf32>
    %17 = vector.broadcast %16 : vector<16x1xf32> to vector<16x128xf32>
    %18 = arith.addf %14, %17 : vector<16x128xf32>
    %cst_15 = arith.constant dense<0.000000e+00> : vector<128xf32>
    %19 = vector.multi_reduction <add>, %18, %cst_15 [0] : vector<16x128xf32> to vector<128xf32>
    %20 = vector.shape_cast %19 : vector<128xf32> to vector<1x128xf32>
    %cst_16 = arith.constant 1.600000e+01 : f32
    %21 = vector.broadcast %cst_16 : f32 to vector<1x128xf32>
    %22 = arith.divf %20, %21 : vector<1x128xf32>
    %23 = vector.broadcast %22 : vector<1x128xf32> to vector<16x128xf32>
    %24 = arith.subf %18, %23 : vector<16x128xf32>
    %25 = arith.mulf %24, %24 : vector<16x128xf32>
    %cst_17 = arith.constant dense<0.000000e+00> : vector<128xf32>
    %26 = vector.multi_reduction <add>, %25, %cst_17 [0] : vector<16x128xf32> to vector<128xf32>
    %27 = vector.shape_cast %26 : vector<128xf32> to vector<1x128xf32>
    %cst_18 = arith.constant 1.600000e+01 : f32
    %28 = vector.broadcast %cst_18 : f32 to vector<1x128xf32>
    %29 = arith.divf %27, %28 : vector<1x128xf32>
    %30 = vector.broadcast %22 : vector<1x128xf32> to vector<16x128xf32>
    %31 = arith.subf %18, %30 : vector<16x128xf32>
    %cst_19 = arith.constant 9.99999974E-6 : f32
    %32 = vector.broadcast %cst_19 : f32 to vector<1x128xf32>
    %33 = arith.addf %29, %32 : vector<1x128xf32>
    %34 = math.rsqrt %33 : vector<1x128xf32>
    %35 = vector.broadcast %34 : vector<1x128xf32> to vector<16x128xf32>
    %36 = arith.mulf %31, %35 : vector<16x128xf32>
    %c0_20 = arith.constant 0 : index
    %c0_21 = arith.constant 0 : index
    %c0_22 = arith.constant 0 : index
    %37 = vector.load %arg7[%c0_20, %c0_21, %c0_22] : memref<1x16x1xf32, #tpu.memory_space<vmem>>, vector<1x16x1xf32>
    %38 = vector.shape_cast %37 : vector<1x16x1xf32> to vector<16x1xf32>
    %39 = vector.broadcast %38 : vector<16x1xf32> to vector<16x128xf32>
    %40 = arith.mulf %36, %39 : vector<16x128xf32>
    %c0_23 = arith.constant 0 : index
    %c0_24 = arith.constant 0 : index
    %c0_25 = arith.constant 0 : index
    %41 = vector.load %arg8[%c0_23, %c0_24, %c0_25] : memref<1x16x1xf32, #tpu.memory_space<vmem>>, vector<1x16x1xf32>
    %42 = vector.shape_cast %41 : vector<1x16x1xf32> to vector<16x1xf32>
    %43 = vector.broadcast %42 : vector<16x1xf32> to vector<16x128xf32>
    %44 = arith.addf %40, %43 : vector<16x128xf32>
    %c0_26 = arith.constant 0 : index
    %c0_27 = arith.constant 0 : index
    %c0_28 = arith.constant 0 : index
    %45 = vector.load %arg9[%c0_26, %c0_27, %c0_28] : memref<1x12x16xf32, #tpu.memory_space<vmem>>, vector<1x12x16xf32>
    %46 = vector.shape_cast %45 : vector<1x12x16xf32> to vector<12x16xf32>
    %47 = arith.truncf %46 : vector<12x16xf32> to vector<12x16xbf16>
    %48 = arith.truncf %44 : vector<16x128xf32> to vector<16x128xbf16>
    %cst_29 = arith.constant dense<0.000000e+00> : vector<12x128xf32>
    %49 = tpu.matmul %47, %48, %cst_29 {dimension_numbers = #tpu.dot_dimension_numbers<[1], [0], [0], [1], [0, 0, 1, 1], [], []>} : vector<12x16xbf16>, vector<16x128xbf16>, vector<12x128xf32> -> vector<12x128xf32>
    %c0_30 = arith.constant 0 : index
    %c0_31 = arith.constant 0 : index
    %c0_32 = arith.constant 0 : index
    %50 = vector.load %arg10[%c0_30, %c0_31, %c0_32] : memref<1x12x1xf32, #tpu.memory_space<vmem>>, vector<1x12x1xf32>
    %51 = vector.shape_cast %50 : vector<1x12x1xf32> to vector<12x1xf32>
    %52 = vector.broadcast %51 : vector<12x1xf32> to vector<12x128xf32>
    %53 = arith.addf %49, %52 : vector<12x128xf32>
    %c0_33 = arith.constant 0 : index
    %c0_34 = arith.constant 0 : index
    %c0_35 = arith.constant 0 : index
    %54 = vector.load %arg11[%c0_33, %c0_34, %c0_35] : memref<1x12x128xf32, #tpu.memory_space<vmem>>, vector<1x12x128xf32>
    %55 = vector.shape_cast %54 : vector<1x12x128xf32> to vector<12x128xf32>
    %56 = vector.shape_cast %53 : vector<12x128xf32> to vector<1x12x128xf32>
    tpu.vector_store %arg11[%c0_33, %c0_34, %c0_35], %56 {strides = array<i32>} : memref<1x12x128xf32, #tpu.memory_space<vmem>>, vector<1x12x128xf32>,
    return
  }
  func.func @transform_0(%arg0: i32, %arg1: i32) -> (i32, i32, i32) {
    %c0_i32 = arith.constant 0 : i32
    %c0_i32_0 = arith.constant 0 : i32
    return %arg0, %c0_i32, %arg1 : i32, i32, i32
  }
  func.func @transform_1(%arg0: i32, %arg1: i32) -> (i32, i32, i32) {
    %c0_i32 = arith.constant 0 : i32
    %c0_i32_0 = arith.constant 0 : i32
    return %arg0, %c0_i32, %arg1 : i32, i32, i32
  }
  func.func @transform_2(%arg0: i32, %arg1: i32) -> (i32, i32, i32) {
    %c0_i32 = arith.constant 0 : i32
    %c0_i32_0 = arith.constant 0 : i32
    %c0_i32_1 = arith.constant 0 : i32
    return %arg0, %c0_i32, %c0_i32_0 : i32, i32, i32
  }
  func.func @transform_3(%arg0: i32, %arg1: i32) -> (i32, i32, i32) {
    %c0_i32 = arith.constant 0 : i32
    %c0_i32_0 = arith.constant 0 : i32
    %c0_i32_1 = arith.constant 0 : i32
    return %arg0, %c0_i32, %c0_i32_0 : i32, i32, i32
  }
  func.func @transform_4(%arg0: i32, %arg1: i32) -> (i32, i32, i32) {
    %c0_i32 = arith.constant 0 : i32
    %c0_i32_0 = arith.constant 0 : i32
    %c0_i32_1 = arith.constant 0 : i32
    return %arg0, %c0_i32, %c0_i32_0 : i32, i32, i32
  }
  func.func @transform_5(%arg0: i32, %arg1: i32) -> (i32, i32, i32) {
    %c0_i32 = arith.constant 0 : i32
    %c0_i32_0 = arith.constant 0 : i32
    %c0_i32_1 = arith.constant 0 : i32
    return %arg0, %c0_i32, %c0_i32_0 : i32, i32, i32
  }
  func.func @transform_6(%arg0: i32, %arg1: i32) -> (i32, i32, i32) {
    %c0_i32 = arith.constant 0 : i32
    %c0_i32_0 = arith.constant 0 : i32
    %c0_i32_1 = arith.constant 0 : i32
    return %arg0, %c0_i32, %c0_i32_0 : i32, i32, i32
  }
  func.func @transform_7(%arg0: i32, %arg1: i32) -> (i32, i32, i32) {
    %c0_i32 = arith.constant 0 : i32
    %c0_i32_0 = arith.constant 0 : i32
    %c0_i32_1 = arith.constant 0 : i32
    return %arg0, %c0_i32, %c0_i32_0 : i32, i32, i32
  }
  func.func @transform_8(%arg0: i32, %arg1: i32) -> (i32, i32, i32) {
    %c0_i32 = arith.constant 0 : i32
    %c0_i32_0 = arith.constant 0 : i32
    %c0_i32_1 = arith.constant 0 : i32
    return %arg0, %c0_i32, %c0_i32_0 : i32, i32, i32
  }
  func.func @transform_9(%arg0: i32, %arg1: i32) -> (i32, i32, i32) {
    %c0_i32 = arith.constant 0 : i32
    %c0_i32_0 = arith.constant 0 : i32
    return %arg0, %c0_i32, %arg1 : i32, i32, i32
  }
}

</mosaic_0001>

<llo_original>
// kernel: squeeze.2
$region0: #{squeeze.2}
  %s0 = inlined_call_operand.vmem [shape: f32[1,12,128], index: 0, kind: input, shape index: {}]
  %s1 = inlined_call_operand.vmem [shape: f32[3,2,2,2,8,8], index: 1, kind: output, shape index: {}]
  %v2 = vld [vmem:[%s0] sm:$0xff]
  %vm3 = vcmask 64512
  %4 = vst.msk [vmem:[%s1] ss:$16 sm:$0x3] %vm3, %v2
  %5 = vst.msk [vmem:[%s1] ss:$16 sm:$0xc] %vm3, %v2
  %6 = vst.msk [vmem:[%s1] ss:$16 sm:$0x30] %vm3, %v2
  %7 = vst.msk [vmem:[%s1] ss:$16 sm:$0xc0] %vm3, %v2
  %s8 = scalar_lea.vmem %s0, 8
  %v9 = vld [vmem:[%s8] sm:$0xf]
  %vm10 = vcmask 64512
  %s11 = scalar_lea.vmem %s1, 128
  %12 = vst.msk [vmem:[%s11] ss:$16 sm:$0x3] %vm10, %v9
  %s13 = scalar_lea.vmem %s1, 128
  %14 = vst.msk [vmem:[%s13] ss:$16 sm:$0xc] %vm10, %v9
  %v15 = vld [vmem:[%s0] sm:$0xff]
  %16 = vrot.lane.b32.xlu0 %v15, 120
  %v17 = vpop.permute.xlu0 %16
  %vm18 = vcmask 64512
  %s19 = scalar_lea.vmem %s1, 1
  %20 = vst.msk [vmem:[%s19] ss:$16 sm:$0x3] %vm18, %v17
  %s21 = scalar_lea.vmem %s1, 1
  %22 = vst.msk [vmem:[%s21] ss:$16 sm:$0xc] %vm18, %v17
  %s23 = scalar_lea.vmem %s1, 1
  %24 = vst.msk [vmem:[%s23] ss:$16 sm:$0x30] %vm18, %v17
  %s25 = scalar_lea.vmem %s1, 1
  %26 = vst.msk [vmem:[%s25] ss:$16 sm:$0xc0] %vm18, %v17
  %s27 = scalar_lea.vmem %s0, 8
  %v28 = vld [vmem:[%s27] sm:$0xf]
  %29 = vrot.lane.b32.xlu0 %v28, 120
  %v30 = vpop.permute.xlu0 %29
  %vm31 = vcmask 64512
  %s32 = scalar_lea.vmem %s1, 129
  %33 = vst.msk [vmem:[%s32] ss:$16 sm:$0x3] %vm31, %v30
  %s34 = scalar_lea.vmem %s1, 129
  %35 = vst.msk [vmem:[%s34] ss:$16 sm:$0xc] %vm31, %v30
  %v36 = vld [vmem:[%s0] sm:$0xff]
  %37 = vrot.lane.b32.xlu0 %v36, 112
  %v38 = vpop.permute.xlu0 %37
  %vm39 = vcmask 64512
  %s40 = scalar_lea.vmem %s1, 2
  %41 = vst.msk [vmem:[%s40] ss:$16 sm:$0x3] %vm39, %v38
  %s42 = scalar_lea.vmem %s1, 2
  %43 = vst.msk [vmem:[%s42] ss:$16 sm:$0xc] %vm39, %v38
  %s44 = scalar_lea.vmem %s1, 2
  %45 = vst.msk [vmem:[%s44] ss:$16 sm:$0x30] %vm39, %v38
  %s46 = scalar_lea.vmem %s1, 2
  %47 = vst.msk [vmem:[%s46] ss:$16 sm:$0xc0] %vm39, %v38
  %s48 = scalar_lea.vmem %s0, 8
  %v49 = vld [vmem:[%s48] sm:$0xf]
  %50 = vrot.lane.b32.xlu0 %v49, 112
  %v51 = vpop.permute.xlu0 %50
  %vm52 = vcmask 64512
  %s53 = scalar_lea.vmem %s1, 130
  %54 = vst.msk [vmem:[%s53] ss:$16 sm:$0x3] %vm52, %v51
  %s55 = scalar_lea.vmem %s1, 130
  %56 = vst.msk [vmem:[%s55] ss:$16 sm:$0xc] %vm52, %v51
  %v57 = vld [vmem:[%s0] sm:$0xff]
  %58 = vrot.lane.b32.xlu0 %v57, 104
  %v59 = vpop.permute.xlu0 %58
  %vm60 = vcmask 64512
  %s61 = scalar_lea.vmem %s1, 3
  %62 = vst.msk [vmem:[%s61] ss:$16 sm:$0x3] %vm60, %v59
  %s63 = scalar_lea.vmem %s1, 3
  %64 = vst.msk [vmem:[%s63] ss:$16 sm:$0xc] %vm60, %v59
  %s65 = scalar_lea.vmem %s1, 3
  %66 = vst.msk [vmem:[%s65] ss:$16 sm:$0x30] %vm60, %v59
  %s67 = scalar_lea.vmem %s1, 3
  %68 = vst.msk [vmem:[%s67] ss:$16 sm:$0xc0] %vm60, %v59
  %s69 = scalar_lea.vmem %s0, 8
  %v70 = vld [vmem:[%s69] sm:$0xf]
  %71 = vrot.lane.b32.xlu0 %v70, 104
  %v72 = vpop.permute.xlu0 %71
  %vm73 = vcmask 64512
  %s74 = scalar_lea.vmem %s1, 131
  %75 = vst.msk [vmem:[%s74] ss:$16 sm:$0x3] %vm73, %v72
  %s76 = scalar_lea.vmem %s1, 131
  %77 = vst.msk [vmem:[%s76] ss:$16 sm:$0xc] %vm73, %v72
  %v78 = vld [vmem:[%s0] sm:$0xff]
  %79 = vrot.lane.b32.xlu0 %v78, 96
  %v80 = vpop.permute.xlu0 %79
  %vm81 = vcmask 64512
  %s82 = scalar_lea.vmem %s1, 4
  %83 = vst.msk [vmem:[%s82] ss:$16 sm:$0x3] %vm81, %v80
  %s84 = scalar_lea.vmem %s1, 4
  %85 = vst.msk [vmem:[%s84] ss:$16 sm:$0xc] %vm81, %v80
  %s86 = scalar_lea.vmem %s1, 4
  %87 = vst.msk [vmem:[%s86] ss:$16 sm:$0x30] %vm81, %v80
  %s88 = scalar_lea.vmem %s1, 4
  %89 = vst.msk [vmem:[%s88] ss:$16 sm:$0xc0] %vm81, %v80
  %s90 = scalar_lea.vmem %s0, 8
  %v91 = vld [vmem:[%s90] sm:$0xf]
  %92 = vrot.lane.b32.xlu0 %v91, 96
  %v93 = vpop.permute.xlu0 %92
  %vm94 = vcmask 64512
  %s95 = scalar_lea.vmem %s1, 132
  %96 = vst.msk [vmem:[%s95] ss:$16 sm:$0x3] %vm94, %v93
  %s97 = scalar_lea.vmem %s1, 132
  %98 = vst.msk [vmem:[%s97] ss:$16 sm:$0xc] %vm94, %v93
  %v99 = vld [vmem:[%s0] sm:$0xff]
  %100 = vrot.lane.b32.xlu0 %v99, 88
  %v101 = vpop.permute.xlu0 %100
  %vm102 = vcmask 64512
  %s103 = scalar_lea.vmem %s1, 5
  %104 = vst.msk [vmem:[%s103] ss:$16 sm:$0x3] %vm102, %v101
  %s105 = scalar_lea.vmem %s1, 5
  %106 = vst.msk [vmem:[%s105] ss:$16 sm:$0xc] %vm102, %v101
  %s107 = scalar_lea.vmem %s1, 5
  %108 = vst.msk [vmem:[%s107] ss:$16 sm:$0x30] %vm102, %v101
  %s109 = scalar_lea.vmem %s1, 5
  %110 = vst.msk [vmem:[%s109] ss:$16 sm:$0xc0] %vm102, %v101
  %s111 = scalar_lea.vmem %s0, 8
  %v112 = vld [vmem:[%s111] sm:$0xf]
  %113 = vrot.lane.b32.xlu0 %v112, 88
  %v114 = vpop.permute.xlu0 %113
  %vm115 = vcmask 64512
  %s116 = scalar_lea.vmem %s1, 133
  %117 = vst.msk [vmem:[%s116] ss:$16 sm:$0x3] %vm115, %v114
  %s118 = scalar_lea.vmem %s1, 133
  %119 = vst.msk [vmem:[%s118] ss:$16 sm:$0xc] %vm115, %v114
  %v120 = vld [vmem:[%s0] sm:$0xff]
  %121 = vrot.lane.b32.xlu0 %v120, 80
  %v122 = vpop.permute.xlu0 %121
  %vm123 = vcmask 64512
  %s124 = scalar_lea.vmem %s1, 6
  %125 = vst.msk [vmem:[%s124] ss:$16 sm:$0x3] %vm123, %v122
  %s126 = scalar_lea.vmem %s1, 6
  %127 = vst.msk [vmem:[%s126] ss:$16 sm:$0xc] %vm123, %v122
  %s128 = scalar_lea.vmem %s1, 6
  %129 = vst.msk [vmem:[%s128] ss:$16 sm:$0x30] %vm123, %v122
  %s130 = scalar_lea.vmem %s1, 6
  %131 = vst.msk [vmem:[%s130] ss:$16 sm:$0xc0] %vm123, %v122
  %s132 = scalar_lea.vmem %s0, 8
  %v133 = vld [vmem:[%s132] sm:$0xf]
  %134 = vrot.lane.b32.xlu0 %v133, 80
  %v135 = vpop.permute.xlu0 %134
  %vm136 = vcmask 64512
  %s137 = scalar_lea.vmem %s1, 134
  %138 = vst.msk [vmem:[%s137] ss:$16 sm:$0x3] %vm136, %v135
  %s139 = scalar_lea.vmem %s1, 134
  %140 = vst.msk [vmem:[%s139] ss:$16 sm:$0xc] %vm136, %v135
  %v141 = vld [vmem:[%s0] sm:$0xff]
  %142 = vrot.lane.b32.xlu0 %v141, 72
  %v143 = vpop.permute.xlu0 %142
  %vm144 = vcmask 64512
  %s145 = scalar_lea.vmem %s1, 7
  %146 = vst.msk [vmem:[%s145] ss:$16 sm:$0x3] %vm144, %v143
  %s147 = scalar_lea.vmem %s1, 7
  %148 = vst.msk [vmem:[%s147] ss:$16 sm:$0xc] %vm144, %v143
  %s149 = scalar_lea.vmem %s1, 7
  %150 = vst.msk [vmem:[%s149] ss:$16 sm:$0x30] %vm144, %v143
  %s151 = scalar_lea.vmem %s1, 7
  %152 = vst.msk [vmem:[%s151] ss:$16 sm:$0xc0] %vm144, %v143
  %s153 = scalar_lea.vmem %s0, 8
  %v154 = vld [vmem:[%s153] sm:$0xf]
  %155 = vrot.lane.b32.xlu0 %v154, 72
  %v156 = vpop.permute.xlu0 %155
  %vm157 = vcmask 64512
  %s158 = scalar_lea.vmem %s1, 135
  %159 = vst.msk [vmem:[%s158] ss:$16 sm:$0x3] %vm157, %v156
  %s160 = scalar_lea.vmem %s1, 135
  %161 = vst.msk [vmem:[%s160] ss:$16 sm:$0xc] %vm157, %v156
  %v162 = vld [vmem:[%s0] sm:$0xff]
  %163 = vrot.lane.b32.xlu0 %v162, 64
  %v164 = vpop.permute.xlu0 %163
  %vm165 = vcmask 64512
  %s166 = scalar_lea.vmem %s1, 8
  %167 = vst.msk [vmem:[%s166] ss:$16 sm:$0x3] %vm165, %v164
  %s168 = scalar_lea.vmem %s1, 8
  %169 = vst.msk [vmem:[%s168] ss:$16 sm:$0xc] %vm165, %v164
  %s170 = scalar_lea.vmem %s1, 8
  %171 = vst.msk [vmem:[%s170] ss:$16 sm:$0x30] %vm165, %v164
  %s172 = scalar_lea.vmem %s1, 8
  %173 = vst.msk [vmem:[%s172] ss:$16 sm:$0xc0] %vm165, %v164
  %s174 = scalar_lea.vmem %s0, 8
  %v175 = vld [vmem:[%s174] sm:$0xf]
  %176 = vrot.lane.b32.xlu0 %v175, 64
  %v177 = vpop.permute.xlu0 %176
  %vm178 = vcmask 64512
  %s179 = scalar_lea.vmem %s1, 136
  %180 = vst.msk [vmem:[%s179] ss:$16 sm:$0x3] %vm178, %v177
  %s181 = scalar_lea.vmem %s1, 136
  %182 = vst.msk [vmem:[%s181] ss:$16 sm:$0xc] %vm178, %v177
  %v183 = vld [vmem:[%s0] sm:$0xff]
  %184 = vrot.lane.b32.xlu0 %v183, 56
  %v185 = vpop.permute.xlu0 %184
  %vm186 = vcmask 64512
  %s187 = scalar_lea.vmem %s1, 9
  %188 = vst.msk [vmem:[%s187] ss:$16 sm:$0x3] %vm186, %v185
  %s189 = scalar_lea.vmem %s1, 9
  %190 = vst.msk [vmem:[%s189] ss:$16 sm:$0xc] %vm186, %v185
  %s191 = scalar_lea.vmem %s1, 9
  %192 = vst.msk [vmem:[%s191] ss:$16 sm:$0x30] %vm186, %v185
  %s193 = scalar_lea.vmem %s1, 9
  %194 = vst.msk [vmem:[%s193] ss:$16 sm:$0xc0] %vm186, %v185
  %s195 = scalar_lea.vmem %s0, 8
  %v196 = vld [vmem:[%s195] sm:$0xf]
  %197 = vrot.lane.b32.xlu0 %v196, 56
  %v198 = vpop.permute.xlu0 %197
  %vm199 = vcmask 64512
  %s200 = scalar_lea.vmem %s1, 137
  %201 = vst.msk [vmem:[%s200] ss:$16 sm:$0x3] %vm199, %v198
  %s202 = scalar_lea.vmem %s1, 137
  %203 = vst.msk [vmem:[%s202] ss:$16 sm:$0xc] %vm199, %v198
  %v204 = vld [vmem:[%s0] sm:$0xff]
  %205 = vrot.lane.b32.xlu0 %v204, 48
  %v206 = vpop.permute.xlu0 %205
  %vm207 = vcmask 64512
  %s208 = scalar_lea.vmem %s1, 10
  %209 = vst.msk [vmem:[%s208] ss:$16 sm:$0x3] %vm207, %v206
  %s210 = scalar_lea.vmem %s1, 10
  %211 = vst.msk [vmem:[%s210] ss:$16 sm:$0xc] %vm207, %v206
  %s212 = scalar_lea.vmem %s1, 10
  %213 = vst.msk [vmem:[%s212] ss:$16 sm:$0x30] %vm207, %v206
  %s214 = scalar_lea.vmem %s1, 10
  %215 = vst.msk [vmem:[%s214] ss:$16 sm:$0xc0] %vm207, %v206
  %s216 = scalar_lea.vmem %s0, 8
  %v217 = vld [vmem:[%s216] sm:$0xf]
  %218 = vrot.lane.b32.xlu0 %v217, 48
  %v219 = vpop.permute.xlu0 %218
  %vm220 = vcmask 64512
  %s221 = scalar_lea.vmem %s1, 138
  %222 = vst.msk [vmem:[%s221] ss:$16 sm:$0x3] %vm220, %v219
  %s223 = scalar_lea.vmem %s1, 138
  %224 = vst.msk [vmem:[%s223] ss:$16 sm:$0xc] %vm220, %v219
  %v225 = vld [vmem:[%s0] sm:$0xff]
  %226 = vrot.lane.b32.xlu0 %v225, 40
  %v227 = vpop.permute.xlu0 %226
  %vm228 = vcmask 64512
  %s229 = scalar_lea.vmem %s1, 11
  %230 = vst.msk [vmem:[%s229] ss:$16 sm:$0x3] %vm228, %v227
  %s231 = scalar_lea.vmem %s1, 11
  %232 = vst.msk [vmem:[%s231] ss:$16 sm:$0xc] %vm228, %v227
  %s233 = scalar_lea.vmem %s1, 11
  %234 = vst.msk [vmem:[%s233] ss:$16 sm:$0x30] %vm228, %v227
  %s235 = scalar_lea.vmem %s1, 11
  %236 = vst.msk [vmem:[%s235] ss:$16 sm:$0xc0] %vm228, %v227
  %s237 = scalar_lea.vmem %s0, 8
  %v238 = vld [vmem:[%s237] sm:$0xf]
  %239 = vrot.lane.b32.xlu0 %v238, 40
  %v240 = vpop.permute.xlu0 %239
  %vm241 = vcmask 64512
  %s242 = scalar_lea.vmem %s1, 139
  %243 = vst.msk [vmem:[%s242] ss:$16 sm:$0x3] %vm241, %v240
  %s244 = scalar_lea.vmem %s1, 139
  %245 = vst.msk [vmem:[%s244] ss:$16 sm:$0xc] %vm241, %v240
  %v246 = vld [vmem:[%s0] sm:$0xff]
  %247 = vrot.lane.b32.xlu0 %v246, 32
  %v248 = vpop.permute.xlu0 %247
  %vm249 = vcmask 64512
  %s250 = scalar_lea.vmem %s1, 12
  %251 = vst.msk [vmem:[%s250] ss:$16 sm:$0x3] %vm249, %v248
  %s252 = scalar_lea.vmem %s1, 12
  %253 = vst.msk [vmem:[%s252] ss:$16 sm:$0xc] %vm249, %v248
  %s254 = scalar_lea.vmem %s1, 12
  %255 = vst.msk [vmem:[%s254] ss:$16 sm:$0x30] %vm249, %v248
  %s256 = scalar_lea.vmem %s1, 12
  %257 = vst.msk [vmem:[%s256] ss:$16 sm:$0xc0] %vm249, %v248
  %s258 = scalar_lea.vmem %s0, 8
  %v259 = vld [vmem:[%s258] sm:$0xf]
  %260 = vrot.lane.b32.xlu0 %v259, 32
  %v261 = vpop.permute.xlu0 %260
  %vm262 = vcmask 64512
  %s263 = scalar_lea.vmem %s1, 140
  %264 = vst.msk [vmem:[%s263] ss:$16 sm:$0x3] %vm262, %v261
  %s265 = scalar_lea.vmem %s1, 140
  %266 = vst.msk [vmem:[%s265] ss:$16 sm:$0xc] %vm262, %v261
  %v267 = vld [vmem:[%s0] sm:$0xff]
  %268 = vrot.lane.b32.xlu0 %v267, 24
  %v269 = vpop.permute.xlu0 %268
  %vm270 = vcmask 64512
  %s271 = scalar_lea.vmem %s1, 13
  %272 = vst.msk [vmem:[%s271] ss:$16 sm:$0x3] %vm270, %v269
  %s273 = scalar_lea.vmem %s1, 13
  %274 = vst.msk [vmem:[%s273] ss:$16 sm:$0xc] %vm270, %v269
  %s275 = scalar_lea.vmem %s1, 13
  %276 = vst.msk [vmem:[%s275] ss:$16 sm:$0x30] %vm270, %v269
  %s277 = scalar_lea.vmem %s1, 13
  %278 = vst.msk [vmem:[%s277] ss:$16 sm:$0xc0] %vm270, %v269
  %s279 = scalar_lea.vmem %s0, 8
  %v280 = vld [vmem:[%s279] sm:$0xf]
  %281 = vrot.lane.b32.xlu0 %v280, 24
  %v282 = vpop.permute.xlu0 %281
  %vm283 = vcmask 64512
  %s284 = scalar_lea.vmem %s1, 141
  %285 = vst.msk [vmem:[%s284] ss:$16 sm:$0x3] %vm283, %v282
  %s286 = scalar_lea.vmem %s1, 141
  %287 = vst.msk [vmem:[%s286] ss:$16 sm:$0xc] %vm283, %v282
  %v288 = vld [vmem:[%s0] sm:$0xff]
  %289 = vrot.lane.b32.xlu0 %v288, 16
  %v290 = vpop.permute.xlu0 %289
  %vm291 = vcmask 64512
  %s292 = scalar_lea.vmem %s1, 14
  %293 = vst.msk [vmem:[%s292] ss:$16 sm:$0x3] %vm291, %v290
  %s294 = scalar_lea.vmem %s1, 14
  %295 = vst.msk [vmem:[%s294] ss:$16 sm:$0xc] %vm291, %v290
  %s296 = scalar_lea.vmem %s1, 14
  %297 = vst.msk [vmem:[%s296] ss:$16 sm:$0x30] %vm291, %v290
  %s298 = scalar_lea.vmem %s1, 14
  %299 = vst.msk [vmem:[%s298] ss:$16 sm:$0xc0] %vm291, %v290
  %s300 = scalar_lea.vmem %s0, 8
  %v301 = vld [vmem:[%s300] sm:$0xf]
  %302 = vrot.lane.b32.xlu0 %v301, 16
  %v303 = vpop.permute.xlu0 %302
  %vm304 = vcmask 64512
  %s305 = scalar_lea.vmem %s1, 142
  %306 = vst.msk [vmem:[%s305] ss:$16 sm:$0x3] %vm304, %v303
  %s307 = scalar_lea.vmem %s1, 142
  %308 = vst.msk [vmem:[%s307] ss:$16 sm:$0xc] %vm304, %v303
  %v309 = vld [vmem:[%s0] sm:$0xff]
  %310 = vrot.lane.b32.xlu0 %v309, 8
  %v311 = vpop.permute.xlu0 %310
  %vm312 = vcmask 64512
  %s313 = scalar_lea.vmem %s1, 15
  %314 = vst.msk [vmem:[%s313] ss:$16 sm:$0x3] %vm312, %v311
  %s315 = scalar_lea.vmem %s1, 15
  %316 = vst.msk [vmem:[%s315] ss:$16 sm:$0xc] %vm312, %v311
  %s317 = scalar_lea.vmem %s1, 15
  %318 = vst.msk [vmem:[%s317] ss:$16 sm:$0x30] %vm312, %v311
  %s319 = scalar_lea.vmem %s1, 15
  %320 = vst.msk [vmem:[%s319] ss:$16 sm:$0xc0] %vm312, %v311
  %s321 = scalar_lea.vmem %s0, 8
  %v322 = vld [vmem:[%s321] sm:$0xf]
  %323 = vrot.lane.b32.xlu0 %v322, 8
  %v324 = vpop.permute.xlu0 %323
  %vm325 = vcmask 64512
  %s326 = scalar_lea.vmem %s1, 143
  %327 = vst.msk [vmem:[%s326] ss:$16 sm:$0x3] %vm325, %v324
  %s328 = scalar_lea.vmem %s1, 143
  %329 = vst.msk [vmem:[%s328] ss:$16 sm:$0xc] %vm325, %v324

// kernel: squeeze.3
$region0: #{squeeze.3}
  %s0 = inlined_call_operand.vmem [shape: f32[1,8,128], index: 0, kind: input, shape index: {}]
  %s1 = inlined_call_operand.vmem [shape: f32[2,2,2,2,8,8], index: 1, kind: output, shape index: {}]
  %v2 = vld [vmem:[%s0] sm:$0xff]
  %vm3 = vcmask 64512
  %4 = vst.msk [vmem:[%s1] ss:$16 sm:$0x3] %vm3, %v2
  %5 = vst.msk [vmem:[%s1] ss:$16 sm:$0xc] %vm3, %v2
  %6 = vst.msk [vmem:[%s1] ss:$16 sm:$0x30] %vm3, %v2
  %7 = vst.msk [vmem:[%s1] ss:$16 sm:$0xc0] %vm3, %v2
  %v8 = vld [vmem:[%s0] sm:$0xff]
  %9 = vrot.lane.b32.xlu0 %v8, 120
  %v10 = vpop.permute.xlu0 %9
  %vm11 = vcmask 64512
  %s12 = scalar_lea.vmem %s1, 1
  %13 = vst.msk [vmem:[%s12] ss:$16 sm:$0x3] %vm11, %v10
  %s14 = scalar_lea.vmem %s1, 1
  %15 = vst.msk [vmem:[%s14] ss:$16 sm:$0xc] %vm11, %v10
  %s16 = scalar_lea.vmem %s1, 1
  %17 = vst.msk [vmem:[%s16] ss:$16 sm:$0x30] %vm11, %v10
  %s18 = scalar_lea.vmem %s1, 1
  %19 = vst.msk [vmem:[%s18] ss:$16 sm:$0xc0] %vm11, %v10
  %v20 = vld [vmem:[%s0] sm:$0xff]
  %21 = vrot.lane.b32.xlu0 %v20, 112
  %v22 = vpop.permute.xlu0 %21
  %vm23 = vcmask 64512
  %s24 = scalar_lea.vmem %s1, 2
  %25 = vst.msk [vmem:[%s24] ss:$16 sm:$0x3] %vm23, %v22
  %s26 = scalar_lea.vmem %s1, 2
  %27 = vst.msk [vmem:[%s26] ss:$16 sm:$0xc] %vm23, %v22
  %s28 = scalar_lea.vmem %s1, 2
  %29 = vst.msk [vmem:[%s28] ss:$16 sm:$0x30] %vm23, %v22
  %s30 = scalar_lea.vmem %s1, 2
  %31 = vst.msk [vmem:[%s30] ss:$16 sm:$0xc0] %vm23, %v22
  %v32 = vld [vmem:[%s0] sm:$0xff]
  %33 = vrot.lane.b32.xlu0 %v32, 104
  %v34 = vpop.permute.xlu0 %33
  %vm35 = vcmask 64512
  %s36 = scalar_lea.vmem %s1, 3
  %37 = vst.msk [vmem:[%s36] ss:$16 sm:$0x3] %vm35, %v34
  %s38 = scalar_lea.vmem %s1, 3
  %39 = vst.msk [vmem:[%s38] ss:$16 sm:$0xc] %vm35, %v34
  %s40 = scalar_lea.vmem %s1, 3
  %41 = vst.msk [vmem:[%s40] ss:$16 sm:$0x30] %vm35, %v34
  %s42 = scalar_lea.vmem %s1, 3
  %43 = vst.msk [vmem:[%s42] ss:$16 sm:$0xc0] %vm35, %v34
  %v44 = vld [vmem:[%s0] sm:$0xff]
  %45 = vrot.lane.b32.xlu0 %v44, 96
  %v46 = vpop.permute.xlu0 %45
  %vm47 = vcmask 64512
  %s48 = scalar_lea.vmem %s1, 4
  %49 = vst.msk [vmem:[%s48] ss:$16 sm:$0x3] %vm47, %v46
  %s50 = scalar_lea.vmem %s1, 4
  %51 = vst.msk [vmem:[%s50] ss:$16 sm:$0xc] %vm47, %v46
  %s52 = scalar_lea.vmem %s1, 4
  %53 = vst.msk [vmem:[%s52] ss:$16 sm:$0x30] %vm47, %v46
  %s54 = scalar_lea.vmem %s1, 4
  %55 = vst.msk [vmem:[%s54] ss:$16 sm:$0xc0] %vm47, %v46
  %v56 = vld [vmem:[%s0] sm:$0xff]
  %57 = vrot.lane.b32.xlu0 %v56, 88
  %v58 = vpop.permute.xlu0 %57
  %vm59 = vcmask 64512
  %s60 = scalar_lea.vmem %s1, 5
  %61 = vst.msk [vmem:[%s60] ss:$16 sm:$0x3] %vm59, %v58
  %s62 = scalar_lea.vmem %s1, 5
  %63 = vst.msk [vmem:[%s62] ss:$16 sm:$0xc] %vm59, %v58
  %s64 = scalar_lea.vmem %s1, 5
  %65 = vst.msk [vmem:[%s64] ss:$16 sm:$0x30] %vm59, %v58
  %s66 = scalar_lea.vmem %s1, 5
  %67 = vst.msk [vmem:[%s66] ss:$16 sm:$0xc0] %vm59, %v58
  %v68 = vld [vmem:[%s0] sm:$0xff]
  %69 = vrot.lane.b32.xlu0 %v68, 80
  %v70 = vpop.permute.xlu0 %69
  %vm71 = vcmask 64512
  %s72 = scalar_lea.vmem %s1, 6
  %73 = vst.msk [vmem:[%s72] ss:$16 sm:$0x3] %vm71, %v70
  %s74 = scalar_lea.vmem %s1, 6
  %75 = vst.msk [vmem:[%s74] ss:$16 sm:$0xc] %vm71, %v70
  %s76 = scalar_lea.vmem %s1, 6
  %77 = vst.msk [vmem:[%s76] ss:$16 sm:$0x30] %vm71, %v70
  %s78 = scalar_lea.vmem %s1, 6
  %79 = vst.msk [vmem:[%s78] ss:$16 sm:$0xc0] %vm71, %v70
  %v80 = vld [vmem:[%s0] sm:$0xff]
  %81 = vrot.lane.b32.xlu0 %v80, 72
  %v82 = vpop.permute.xlu0 %81
  %vm83 = vcmask 64512
  %s84 = scalar_lea.vmem %s1, 7
  %85 = vst.msk [vmem:[%s84] ss:$16 sm:$0x3] %vm83, %v82
  %s86 = scalar_lea.vmem %s1, 7
  %87 = vst.msk [vmem:[%s86] ss:$16 sm:$0xc] %vm83, %v82
  %s88 = scalar_lea.vmem %s1, 7
  %89 = vst.msk [vmem:[%s88] ss:$16 sm:$0x30] %vm83, %v82
  %s90 = scalar_lea.vmem %s1, 7
  %91 = vst.msk [vmem:[%s90] ss:$16 sm:$0xc0] %vm83, %v82
  %v92 = vld [vmem:[%s0] sm:$0xff]
  %93 = vrot.lane.b32.xlu0 %v92, 64
  %v94 = vpop.permute.xlu0 %93
  %vm95 = vcmask 64512
  %s96 = scalar_lea.vmem %s1, 8
  %97 = vst.msk [vmem:[%s96] ss:$16 sm:$0x3] %vm95, %v94
  %s98 = scalar_lea.vmem %s1, 8
  %99 = vst.msk [vmem:[%s98] ss:$16 sm:$0xc] %vm95, %v94
  %s100 = scalar_lea.vmem %s1, 8
  %101 = vst.msk [vmem:[%s100] ss:$16 sm:$0x30] %vm95, %v94
  %s102 = scalar_lea.vmem %s1, 8
  %103 = vst.msk [vmem:[%s102] ss:$16 sm:$0xc0] %vm95, %v94
  %v104 = vld [vmem:[%s0] sm:$0xff]
  %105 = vrot.lane.b32.xlu0 %v104, 56
  %v106 = vpop.permute.xlu0 %105
  %vm107 = vcmask 64512
  %s108 = scalar_lea.vmem %s1, 9
  %109 = vst.msk [vmem:[%s108] ss:$16 sm:$0x3] %vm107, %v106
  %s110 = scalar_lea.vmem %s1, 9
  %111 = vst.msk [vmem:[%s110] ss:$16 sm:$0xc] %vm107, %v106
  %s112 = scalar_lea.vmem %s1, 9
  %113 = vst.msk [vmem:[%s112] ss:$16 sm:$0x30] %vm107, %v106
  %s114 = scalar_lea.vmem %s1, 9
  %115 = vst.msk [vmem:[%s114] ss:$16 sm:$0xc0] %vm107, %v106
  %v116 = vld [vmem:[%s0] sm:$0xff]
  %117 = vrot.lane.b32.xlu0 %v116, 48
  %v118 = vpop.permute.xlu0 %117
  %vm119 = vcmask 64512
  %s120 = scalar_lea.vmem %s1, 10
  %121 = vst.msk [vmem:[%s120] ss:$16 sm:$0x3] %vm119, %v118
  %s122 = scalar_lea.vmem %s1, 10
  %123 = vst.msk [vmem:[%s122] ss:$16 sm:$0xc] %vm119, %v118
  %s124 = scalar_lea.vmem %s1, 10
  %125 = vst.msk [vmem:[%s124] ss:$16 sm:$0x30] %vm119, %v118
  %s126 = scalar_lea.vmem %s1, 10
  %127 = vst.msk [vmem:[%s126] ss:$16 sm:$0xc0] %vm119, %v118
  %v128 = vld [vmem:[%s0] sm:$0xff]
  %129 = vrot.lane.b32.xlu0 %v128, 40
  %v130 = vpop.permute.xlu0 %129
  %vm131 = vcmask 64512
  %s132 = scalar_lea.vmem %s1, 11
  %133 = vst.msk [vmem:[%s132] ss:$16 sm:$0x3] %vm131, %v130
  %s134 = scalar_lea.vmem %s1, 11
  %135 = vst.msk [vmem:[%s134] ss:$16 sm:$0xc] %vm131, %v130
  %s136 = scalar_lea.vmem %s1, 11
  %137 = vst.msk [vmem:[%s136] ss:$16 sm:$0x30] %vm131, %v130
  %s138 = scalar_lea.vmem %s1, 11
  %139 = vst.msk [vmem:[%s138] ss:$16 sm:$0xc0] %vm131, %v130
  %v140 = vld [vmem:[%s0] sm:$0xff]
  %141 = vrot.lane.b32.xlu0 %v140, 32
  %v142 = vpop.permute.xlu0 %141
  %vm143 = vcmask 64512
  %s144 = scalar_lea.vmem %s1, 12
  %145 = vst.msk [vmem:[%s144] ss:$16 sm:$0x3] %vm143, %v142
  %s146 = scalar_lea.vmem %s1, 12
  %147 = vst.msk [vmem:[%s146] ss:$16 sm:$0xc] %vm143, %v142
  %s148 = scalar_lea.vmem %s1, 12
  %149 = vst.msk [vmem:[%s148] ss:$16 sm:$0x30] %vm143, %v142
  %s150 = scalar_lea.vmem %s1, 12
  %151 = vst.msk [vmem:[%s150] ss:$16 sm:$0xc0] %vm143, %v142
  %v152 = vld [vmem:[%s0] sm:$0xff]
  %153 = vrot.lane.b32.xlu0 %v152, 24
  %v154 = vpop.permute.xlu0 %153
  %vm155 = vcmask 64512
  %s156 = scalar_lea.vmem %s1, 13
  %157 = vst.msk [vmem:[%s156] ss:$16 sm:$0x3] %vm155, %v154
  %s158 = scalar_lea.vmem %s1, 13
  %159 = vst.msk [vmem:[%s158] ss:$16 sm:$0xc] %vm155, %v154
  %s160 = scalar_lea.vmem %s1, 13
  %161 = vst.msk [vmem:[%s160] ss:$16 sm:$0x30] %vm155, %v154
  %s162 = scalar_lea.vmem %s1, 13
  %163 = vst.msk [vmem:[%s162] ss:$16 sm:$0xc0] %vm155, %v154
  %v164 = vld [vmem:[%s0] sm:$0xff]
  %165 = vrot.lane.b32.xlu0 %v164, 16
  %v166 = vpop.permute.xlu0 %165
  %vm167 = vcmask 64512
  %s168 = scalar_lea.vmem %s1, 14
  %169 = vst.msk [vmem:[%s168] ss:$16 sm:$0x3] %vm167, %v166
  %s170 = scalar_lea.vmem %s1, 14
  %171 = vst.msk [vmem:[%s170] ss:$16 sm:$0xc] %vm167, %v166
  %s172 = scalar_lea.vmem %s1, 14
  %173 = vst.msk [vmem:[%s172] ss:$16 sm:$0x30] %vm167, %v166
  %s174 = scalar_lea.vmem %s1, 14
  %175 = vst.msk [vmem:[%s174] ss:$16 sm:$0xc0] %vm167, %v166
  %v176 = vld [vmem:[%s0] sm:$0xff]
  %177 = vrot.lane.b32.xlu0 %v176, 8
  %v178 = vpop.permute.xlu0 %177
  %vm179 = vcmask 64512
  %s180 = scalar_lea.vmem %s1, 15
  %181 = vst.msk [vmem:[%s180] ss:$16 sm:$0x3] %vm179, %v178
  %s182 = scalar_lea.vmem %s1, 15
  %183 = vst.msk [vmem:[%s182] ss:$16 sm:$0xc] %vm179, %v178
  %s184 = scalar_lea.vmem %s1, 15
  %185 = vst.msk [vmem:[%s184] ss:$16 sm:$0x30] %vm179, %v178
  %s186 = scalar_lea.vmem %s1, 15
  %187 = vst.msk [vmem:[%s186] ss:$16 sm:$0xc0] %vm179, %v178

// kernel: ocean_decoders_forward.3
$region0: #{ocean_decoders_forward.3}
  #allocation0 [shape = 'u32[]', space=smem, size = 0x4, offset = 0x4, fixed_abs, tag = 'smem constant byte address 0x4 - core index']
  #allocation1 [shape = 'u32[144,128]{1,0:T(1,128)}', space=vmem, size = 0x12000, scoped, tag = 'internal scratch']
  %s0 = inlined_call_operand.vmem [shape: f32[2,16,128], index: 0, kind: input, shape index: {}]
  %s1 = inlined_call_operand.vmem [shape: f32[2,16,128], index: 1, kind: input, shape index: {}]
  %s2 = inlined_call_operand.vmem [shape: f32[2,16,16], index: 2, kind: input, shape index: {}]
  %s3 = inlined_call_operand.vmem [shape: f32[2,16,16], index: 3, kind: input, shape index: {}]
  %s4 = inlined_call_operand.vmem [shape: f32[2,16,1], index: 4, kind: input, shape index: {}]
  %s5 = inlined_call_operand.vmem [shape: f32[2,16,1], index: 5, kind: input, shape index: {}]
  %s6 = inlined_call_operand.vmem [shape: f32[2,16,1], index: 6, kind: input, shape index: {}]
  %s7 = inlined_call_operand.vmem [shape: f32[2,12,16], index: 7, kind: input, shape index: {}]
  %s8 = inlined_call_operand.vmem [shape: f32[2,12,1], index: 8, kind: input, shape index: {}]
  %s9 = inlined_call_operand.vmem [shape: f32[2,12,128], index: 9, kind: output, shape index: {}]
  %s10 = sld [smem:[#allocation0]]
  $region69: #{ocean_decoders_forward.3} parent=0
    _
  %s12 = ssub.s32 1, %s10
  %s13 = scalar_select 0, %s12, %s10
  loop: start=0, step=1, limit=4
  $region2: #{ocean_decoders_forward.3} parent=0 // loop_pre_header
    _
  $region3: #{ocean_decoders_forward.3} parent=0 // loop_header
    %s15 = sphi 0, %s19
    %p16 = scmp.ge.s32.totalorder %s15, 4
    %s22 = sphi 0, %s34
    %s23 = sphi 0, %s30
    %s24 = sphi 0, %s22
    %s25 = sphi 0, %s23
    %s26 = sphi 0, %s24
    %s27 = sphi 0, %s25
    %s39 = sphi 0, %s41
    %s42 = sphi 0, %s39
    %s43 = sphi 0, %s42
    %s59 = sphi 0, %s43
    %s67 = sphi 0, %s69
    %s70 = sphi 0, %s67
    %s71 = sphi 0, %s70
    %s87 = sphi 0, %s71
    %s93 = sphi 0, %s95
    %s96 = sphi 0, %s93
    %s97 = sphi 0, %s96
    %s113 = sphi 0, %s97
    %s119 = sphi 0, %s121
    %s122 = sphi 0, %s119
    %s123 = sphi 0, %s122
    %s139 = sphi 0, %s123
    %s145 = sphi 0, %s147
    %s148 = sphi 0, %s145
    %s149 = sphi 0, %s148
    %s165 = sphi 0, %s149
    %s171 = sphi 0, %s173
    %s174 = sphi 0, %s171
    %s175 = sphi 0, %s174
    %s191 = sphi 0, %s175
    %s197 = sphi 0, %s199
    %s200 = sphi 0, %s197
    %s201 = sphi 0, %s200
    %s217 = sphi 0, %s201
    %s223 = sphi 0, %s225
    %s226 = sphi 0, %s223
    %s227 = sphi 0, %s226
    %s243 = sphi 0, %s227
    %s249 = sphi 0, %s251
    %s252 = sphi 0, %s249
    %s253 = sphi 0, %s252
    %s269 = sphi 0, %s253
    %s277 = sphi 0, %s279
    %s280 = sphi 0, %s277
    %s281 = sphi 0, %s280
    %s297 = sphi 0, %s281
  $region4: #{ocean_decoders_forward.3} parent=0 // loop_header_branch
    %18 = sbr.rel (%p16) target = $region8
  $region5: #{ocean_decoders_forward.3} parent=0 // loop_body
    %s20 = ssub.s32 %s15, 1
    %s21 = ssub.s32 %s15, 2
    %s28 = sadd.s32 1, %s23
    %p29 = scmp.ge.s32.totalorder %s28, 1
    %s30 = scalar_select %p29, 0, %s28
    %s31 = sadd.s32 1, %s22
    %s32 = scalar_select %p29, %s31, %s22
    %p33 = scmp.ge.s32.totalorder %s32, 2
    %s34 = scalar_select %p33, 0, %s32
    %s35 = ssub.s32 %s22, %s34
    %s36 = ssub.s32 %s23, %s30
    %s37 = sor.u32 %s35, %s36
    %p38 = scmp.eq.s32.totalorder %s37, 0
    %s40 = sadd.s32 %s39, 1
    %s41 = scalar_select %p38, %s39, %s40
    %p44 = pneg %p38
    %p45 = scmp.eq.s32.totalorder %s15, 1
    %p46 = por %p44, %p45
    %p47 = scmp.ne.s32.totalorder %s39, %s42
    %p48 = scmp.eq.s32.totalorder %s15, 0
    %p49 = por %p47, %p48
    %p50 = scmp.ne.s32.totalorder %s39, %s42
    %p51 = scmp.eq.s32.totalorder %s20, 1
    %p52 = por %p50, %p51
    %p53 = scmp.ne.s32.totalorder %s42, %s43
    %p54 = scmp.eq.s32.totalorder %s20, 0
    %p55 = por %p53, %p54
    %p56 = scmp.ne.s32.totalorder %s42, %s43
    %p57 = scmp.eq.s32.totalorder %s21, 1
    %p58 = por %p56, %p57
    %p60 = scmp.ne.s32.totalorder %s43, %s59
    %p61 = scmp.eq.s32.totalorder %s21, 0
    %p62 = por %p60, %p61
    %s63 = ssub.s32 %s22, %s34
    %s64 = ssub.s32 %s23, %s30
    %s65 = sor.u32 %s63, %s64
    %p66 = scmp.eq.s32.totalorder %s65, 0
    %s68 = sadd.s32 %s67, 1
    %s69 = scalar_select %p66, %s67, %s68
    %p72 = pneg %p66
    %p73 = scmp.eq.s32.totalorder %s15, 1
    %p74 = por %p72, %p73
    %p75 = scmp.ne.s32.totalorder %s67, %s70
    %p76 = scmp.eq.s32.totalorder %s15, 0
    %p77 = por %p75, %p76
    %p78 = scmp.ne.s32.totalorder %s67, %s70
    %p79 = scmp.eq.s32.totalorder %s20, 1
    %p80 = por %p78, %p79
    %p81 = scmp.ne.s32.totalorder %s70, %s71
    %p82 = scmp.eq.s32.totalorder %s20, 0
    %p83 = por %p81, %p82
    %p84 = scmp.ne.s32.totalorder %s70, %s71
    %p85 = scmp.eq.s32.totalorder %s21, 1
    %p86 = por %p84, %p85
    %p88 = scmp.ne.s32.totalorder %s71, %s87
    %p89 = scmp.eq.s32.totalorder %s21, 0
    %p90 = por %p88, %p89
    %s91 = ssub.s32 %s22, %s34
    %p92 = scmp.eq.s32.totalorder %s91, 0
    %s94 = sadd.s32 %s93, 1
    %s95 = scalar_select %p92, %s93, %s94
    %p98 = pneg %p92
    %p99 = scmp.eq.s32.totalorder %s15, 1
    %p100 = por %p98, %p99
    %p101 = scmp.ne.s32.totalorder %s93, %s96
    %p102 = scmp.eq.s32.totalorder %s15, 0
    %p103 = por %p101, %p102
    %p104 = scmp.ne.s32.totalorder %s93, %s96
    %p105 = scmp.eq.s32.totalorder %s20, 1
    %p106 = por %p104, %p105
    %p107 = scmp.ne.s32.totalorder %s96, %s97
    %p108 = scmp.eq.s32.totalorder %s20, 0
    %p109 = por %p107, %p108
    %p110 = scmp.ne.s32.totalorder %s96, %s97
    %p111 = scmp.eq.s32.totalorder %s21, 1
    %p112 = por %p110, %p111
    %p114 = scmp.ne.s32.totalorder %s97, %s113
    %p115 = scmp.eq.s32.totalorder %s21, 0
    %p116 = por %p114, %p115
    %s117 = ssub.s32 %s22, %s34
    %p118 = scmp.eq.s32.totalorder %s117, 0
    %s120 = sadd.s32 %s119, 1
    %s121 = scalar_select %p118, %s119, %s120
    %p124 = pneg %p118
    %p125 = scmp.eq.s32.totalorder %s15, 1
    %p126 = por %p124, %p125
    %p127 = scmp.ne.s32.totalorder %s119, %s122
    %p128 = scmp.eq.s32.totalorder %s15, 0
    %p129 = por %p127, %p128
    %p130 = scmp.ne.s32.totalorder %s119, %s122
    %p131 = scmp.eq.s32.totalorder %s20, 1
    %p132 = por %p130, %p131
    %p133 = scmp.ne.s32.totalorder %s122, %s123
    %p134 = scmp.eq.s32.totalorder %s20, 0
    %p135 = por %p133, %p134
    %p136 = scmp.ne.s32.totalorder %s122, %s123
    %p137 = scmp.eq.s32.totalorder %s21, 1
    %p138 = por %p136, %p137
    %p140 = scmp.ne.s32.totalorder %s123, %s139
    %p141 = scmp.eq.s32.totalorder %s21, 0
    %p142 = por %p140, %p141
    %s143 = ssub.s32 %s22, %s34
    %p144 = scmp.eq.s32.totalorder %s143, 0
    %s146 = sadd.s32 %s145, 1
    %s147 = scalar_select %p144, %s145, %s146
    %p150 = pneg %p144
    %p151 = scmp.eq.s32.totalorder %s15, 1
    %p152 = por %p150, %p151
    %p153 = scmp.ne.s32.totalorder %s145, %s148
    %p154 = scmp.eq.s32.totalorder %s15, 0
    %p155 = por %p153, %p154
    %p156 = scmp.ne.s32.totalorder %s145, %s148
    %p157 = scmp.eq.s32.totalorder %s20, 1
    %p158 = por %p156, %p157
    %p159 = scmp.ne.s32.totalorder %s148, %s149
    %p160 = scmp.eq.s32.totalorder %s20, 0
    %p161 = por %p159, %p160
    %p162 = scmp.ne.s32.totalorder %s148, %s149
    %p163 = scmp.eq.s32.totalorder %s21, 1
    %p164 = por %p162, %p163
    %p166 = scmp.ne.s32.totalorder %s149, %s165
    %p167 = scmp.eq.s32.totalorder %s21, 0
    %p168 = por %p166, %p167
    %s169 = ssub.s32 %s22, %s34
    %p170 = scmp.eq.s32.totalorder %s169, 0
    %s172 = sadd.s32 %s171, 1
    %s173 = scalar_select %p170, %s171, %s172
    %p176 = pneg %p170
    %p177 = scmp.eq.s32.totalorder %s15, 1
    %p178 = por %p176, %p177
    %p179 = scmp.ne.s32.totalorder %s171, %s174
    %p180 = scmp.eq.s32.totalorder %s15, 0
    %p181 = por %p179, %p180
    %p182 = scmp.ne.s32.totalorder %s171, %s174
    %p183 = scmp.eq.s32.totalorder %s20, 1
    %p184 = por %p182, %p183
    %p185 = scmp.ne.s32.totalorder %s174, %s175
    %p186 = scmp.eq.s32.totalorder %s20, 0
    %p187 = por %p185, %p186
    %p188 = scmp.ne.s32.totalorder %s174, %s175
    %p189 = scmp.eq.s32.totalorder %s21, 1
    %p190 = por %p188, %p189
    %p192 = scmp.ne.s32.totalorder %s175, %s191
    %p193 = scmp.eq.s32.totalorder %s21, 0
    %p194 = por %p192, %p193
    %s195 = ssub.s32 %s22, %s34
    %p196 = scmp.eq.s32.totalorder %s195, 0
    %s198 = sadd.s32 %s197, 1
    %s199 = scalar_select %p196, %s197, %s198
    %p202 = pneg %p196
    %p203 = scmp.eq.s32.totalorder %s15, 1
    %p204 = por %p202, %p203
    %p205 = scmp.ne.s32.totalorder %s197, %s200
    %p206 = scmp.eq.s32.totalorder %s15, 0
    %p207 = por %p205, %p206
    %p208 = scmp.ne.s32.totalorder %s197, %s200
    %p209 = scmp.eq.s32.totalorder %s20, 1
    %p210 = por %p208, %p209
    %p211 = scmp.ne.s32.totalorder %s200, %s201
    %p212 = scmp.eq.s32.totalorder %s20, 0
    %p213 = por %p211, %p212
    %p214 = scmp.ne.s32.totalorder %s200, %s201
    %p215 = scmp.eq.s32.totalorder %s21, 1
    %p216 = por %p214, %p215
    %p218 = scmp.ne.s32.totalorder %s201, %s217
    %p219 = scmp.eq.s32.totalorder %s21, 0
    %p220 = por %p218, %p219
    %s221 = ssub.s32 %s22, %s34
    %p222 = scmp.eq.s32.totalorder %s221, 0
    %s224 = sadd.s32 %s223, 1
    %s225 = scalar_select %p222, %s223, %s224
    %p228 = pneg %p222
    %p229 = scmp.eq.s32.totalorder %s15, 1
    %p230 = por %p228, %p229
    %p231 = scmp.ne.s32.totalorder %s223, %s226
    %p232 = scmp.eq.s32.totalorder %s15, 0
    %p233 = por %p231, %p232
    %p234 = scmp.ne.s32.totalorder %s223, %s226
    %p235 = scmp.eq.s32.totalorder %s20, 1
    %p236 = por %p234, %p235
    %p237 = scmp.ne.s32.totalorder %s226, %s227
    %p238 = scmp.eq.s32.totalorder %s20, 0
    %p239 = por %p237, %p238
    %p240 = scmp.ne.s32.totalorder %s226, %s227
    %p241 = scmp.eq.s32.totalorder %s21, 1
    %p242 = por %p240, %p241
    %p244 = scmp.ne.s32.totalorder %s227, %s243
    %p245 = scmp.eq.s32.totalorder %s21, 0
    %p246 = por %p244, %p245
    %s247 = ssub.s32 %s22, %s34
    %p248 = scmp.eq.s32.totalorder %s247, 0
    %s250 = sadd.s32 %s249, 1
    %s251 = scalar_select %p248, %s249, %s250
    %p254 = pneg %p248
    %p255 = scmp.eq.s32.totalorder %s15, 1
    %p256 = por %p254, %p255
    %p257 = scmp.ne.s32.totalorder %s249, %s252
    %p258 = scmp.eq.s32.totalorder %s15, 0
    %p259 = por %p257, %p258
    %p260 = scmp.ne.s32.totalorder %s249, %s252
    %p261 = scmp.eq.s32.totalorder %s20, 1
    %p262 = por %p260, %p261
    %p263 = scmp.ne.s32.totalorder %s252, %s253
    %p264 = scmp.eq.s32.totalorder %s20, 0
    %p265 = por %p263, %p264
    %p266 = scmp.ne.s32.totalorder %s252, %s253
    %p267 = scmp.eq.s32.totalorder %s21, 1
    %p268 = por %p266, %p267
    %p270 = scmp.ne.s32.totalorder %s253, %s269
    %p271 = scmp.eq.s32.totalorder %s21, 0
    %p272 = por %p270, %p271
    %s273 = ssub.s32 %s22, %s34
    %s274 = ssub.s32 %s23, %s30
    %s275 = sor.u32 %s273, %s274
    %p276 = scmp.eq.s32.totalorder %s275, 0
    %s278 = sadd.s32 %s277, 1
    %s279 = scalar_select %p276, %s277, %s278
    %p282 = pneg %p276
    %p283 = scmp.eq.s32.totalorder %s15, 1
    %p284 = por %p282, %p283
    %p285 = scmp.ne.s32.totalorder %s277, %s280
    %p286 = scmp.eq.s32.totalorder %s15, 0
    %p287 = por %p285, %p286
    %p288 = scmp.ne.s32.totalorder %s277, %s280
    %p289 = scmp.eq.s32.totalorder %s20, 1
    %p290 = por %p288, %p289
    %p291 = scmp.ne.s32.totalorder %s280, %s281
    %p292 = scmp.eq.s32.totalorder %s20, 0
    %p293 = por %p291, %p292
    %p294 = scmp.ne.s32.totalorder %s280, %s281
    %p295 = scmp.eq.s32.totalorder %s21, 1
    %p296 = por %p294, %p295
    %p298 = scmp.ne.s32.totalorder %s281, %s297
    %p299 = scmp.eq.s32.totalorder %s21, 0
    %p300 = por %p298, %p299
    %p301 = scmp.le.s32.totalorder 1, %s15
    %p302 = scmp.lt.s32.totalorder %s15, 3
    %p303 = pnand %p301, %p302
    %p304 = pneg %p303
    // Predicated region
    $region9: #{ocean_decoders_forward.3} parent=5 // pred_check
      _
    $region10: #{ocean_decoders_forward.3} parent=5 // pred_check_branch
      %306 = sbr.rel (%p303) target = $region12
    $region11: #{ocean_decoders_forward.3} parent=5 // pred_region
      %s307 = ssub.s32 %s15, 1
    $region12: #{ocean_decoders_forward.3} parent=5 // pred_fallthru
      _
    %p308 = scmp.lt.s32.totalorder %s15, 2
    // Predicated region
    $region13: #{ocean_decoders_forward.3} parent=5 // pred_check
      %p309 = pneg %p308
    $region14: #{ocean_decoders_forward.3} parent=5 // pred_check_branch
      %311 = sbr.rel (%p309) target = $region16
    $region15: #{ocean_decoders_forward.3} parent=5 // pred_region
      // Predicated region
      $region17: #{ocean_decoders_forward.3} parent=15 // pred_check
        %p312 = pneg %p49
      $region18: #{ocean_decoders_forward.3} parent=15 // pred_check_branch
        %314 = sbr.rel (%p312) target = $region20
      $region19: #{ocean_decoders_forward.3} parent=15 // pred_region
        %p315 = scmp.lt.s32.totalorder %s22, 1
        %s316 = scalar_select %p315, %s22, 1
        %p317 = scmp.lt.s32.totalorder %s23, 0
        %s318 = scalar_select %p317, %s23, 0
        %s319 = smul.addr %s316, 2
        %s320 = sadd.s32 %s318, %s319
        %s321 = smul.addr %s320, 8
        %s322 = scalar_lea.vmem %s0, %s321
      $region20: #{ocean_decoders_forward.3} parent=15 // pred_fallthru
        _
      // Predicated region
      $region21: #{ocean_decoders_forward.3} parent=15 // pred_check
        %p323 = pneg %p77
      $region22: #{ocean_decoders_forward.3} parent=15 // pred_check_branch
        %325 = sbr.rel (%p323) target = $region24
      $region23: #{ocean_decoders_forward.3} parent=15 // pred_region
        %p326 = scmp.lt.s32.totalorder %s22, 1
        %s327 = scalar_select %p326, %s22, 1
        %p328 = scmp.lt.s32.totalorder %s23, 0
        %s329 = scalar_select %p328, %s23, 0
        %s330 = smul.addr %s327, 2
        %s331 = sadd.s32 %s329, %s330
        %s332 = smul.addr %s331, 8
        %s333 = scalar_lea.vmem %s1, %s332
      $region24: #{ocean_decoders_forward.3} parent=15 // pred_fallthru
        _
      // Predicated region
      $region25: #{ocean_decoders_forward.3} parent=15 // pred_check
        %p334 = pneg %p103
      $region26: #{ocean_decoders_forward.3} parent=15 // pred_check_branch
        %336 = sbr.rel (%p334) target = $region28
      $region27: #{ocean_decoders_forward.3} parent=15 // pred_region
        %p337 = scmp.lt.s32.totalorder %s22, 1
        %s338 = scalar_select %p337, %s22, 1
        %s339 = smul.addr %s338, 2
        %s340 = smul.addr %s339, 8
        %s341 = scalar_lea.vmem %s2, %s340
      $region28: #{ocean_decoders_forward.3} parent=15 // pred_fallthru
        _
      // Predicated region
      $region29: #{ocean_decoders_forward.3} parent=15 // pred_check
        %p342 = pneg %p129
      $region30: #{ocean_decoders_forward.3} parent=15 // pred_check_branch
        %344 = sbr.rel (%p342) target = $region32
      $region31: #{ocean_decoders_forward.3} parent=15 // pred_region
        %p345 = scmp.lt.s32.totalorder %s22, 1
        %s346 = scalar_select %p345, %s22, 1
        %s347 = smul.addr %s346, 2
        %s348 = smul.addr %s347, 8
        %s349 = scalar_lea.vmem %s3, %s348
      $region32: #{ocean_decoders_forward.3} parent=15 // pred_fallthru
        _
      // Predicated region
      $region33: #{ocean_decoders_forward.3} parent=15 // pred_check
        %p350 = pneg %p155
      $region34: #{ocean_decoders_forward.3} parent=15 // pred_check_branch
        %352 = sbr.rel (%p350) target = $region36
      $region35: #{ocean_decoders_forward.3} parent=15 // pred_region
        %p353 = scmp.lt.s32.totalorder %s22, 1
        %s354 = scalar_select %p353, %s22, 1
        %s355 = smul.addr %s354, 2
        %s356 = smul.addr %s355, 8
        %s357 = scalar_lea.vmem %s4, %s356
      $region36: #{ocean_decoders_forward.3} parent=15 // pred_fallthru
        _
      // Predicated region
      $region37: #{ocean_decoders_forward.3} parent=15 // pred_check
        %p358 = pneg %p181
      $region38: #{ocean_decoders_forward.3} parent=15 // pred_check_branch
        %360 = sbr.rel (%p358) target = $region40
      $region39: #{ocean_decoders_forward.3} parent=15 // pred_region
        %p361 = scmp.lt.s32.totalorder %s22, 1
        %s362 = scalar_select %p361, %s22, 1
        %s363 = smul.addr %s362, 2
        %s364 = smul.addr %s363, 8
        %s365 = scalar_lea.vmem %s5, %s364
      $region40: #{ocean_decoders_forward.3} parent=15 // pred_fallthru
        _
      // Predicated region
      $region41: #{ocean_decoders_forward.3} parent=15 // pred_check
        %p366 = pneg %p207
      $region42: #{ocean_decoders_forward.3} parent=15 // pred_check_branch
        %368 = sbr.rel (%p366) target = $region44
      $region43: #{ocean_decoders_forward.3} parent=15 // pred_region
        %p369 = scmp.lt.s32.totalorder %s22, 1
        %s370 = scalar_select %p369, %s22, 1
        %s371 = smul.addr %s370, 2
        %s372 = smul.addr %s371, 8
        %s373 = scalar_lea.vmem %s6, %s372
      $region44: #{ocean_decoders_forward.3} parent=15 // pred_fallthru
        _
      // Predicated region
      $region45: #{ocean_decoders_forward.3} parent=15 // pred_check
        %p374 = pneg %p233
      $region46: #{ocean_decoders_forward.3} parent=15 // pred_check_branch
        %376 = sbr.rel (%p374) target = $region48
      $region47: #{ocean_decoders_forward.3} parent=15 // pred_region
        %p377 = scmp.lt.s32.totalorder %s22, 1
        %s378 = scalar_select %p377, %s22, 1
        %s379 = smul.addr %s378, 2
        %s380 = smul.addr %s379, 8
        %s381 = scalar_lea.vmem %s7, %s380
      $region48: #{ocean_decoders_forward.3} parent=15 // pred_fallthru
        _
      // Predicated region
      $region49: #{ocean_decoders_forward.3} parent=15 // pred_check
        %p382 = pneg %p259
      $region50: #{ocean_decoders_forward.3} parent=15 // pred_check_branch
        %384 = sbr.rel (%p382) target = $region52
      $region51: #{ocean_decoders_forward.3} parent=15 // pred_region
        %p385 = scmp.lt.s32.totalorder %s22, 1
        %s386 = scalar_select %p385, %s22, 1
        %s387 = smul.addr %s386, 2
        %s388 = smul.addr %s387, 8
        %s389 = scalar_lea.vmem %s8, %s388
      $region52: #{ocean_decoders_forward.3} parent=15 // pred_fallthru
        _
    $region16: #{ocean_decoders_forward.3} parent=5 // pred_fallthru
      _
    %p390 = scmp.le.s32.totalorder 1, %s15
    %p391 = scmp.lt.s32.totalorder %s15, 3
    %p392 = pnand %p390, %p391
    %p393 = pneg %p392
    // Predicated region
    $region53: #{ocean_decoders_forward.3} parent=5 // pred_check
      _
    $region54: #{ocean_decoders_forward.3} parent=5 // pred_check_branch
      %395 = sbr.rel (%p392) target = $region56
    $region55: #{ocean_decoders_forward.3} parent=5 // pred_region
      %s396 = ssub.s32 %s15, 1
      %p397 = scmp.lt.s32.totalorder %s24, 1
      %s398 = scalar_select %p397, %s24, 1
      %p399 = scmp.lt.s32.totalorder %s25, 0
      %s400 = scalar_select %p399, %s25, 0
      %s401 = smul.addr %s398, 2
      %s402 = sadd.s32 %s400, %s401
      %s403 = smul.addr %s402, 8
      %s404 = scalar_lea.vmem %s0, %s403
      %p405 = pneg %p55
      %p406 = pneg %p52
      %p407 = scmp.lt.s32.totalorder %s24, 1
      %s408 = scalar_select %p407, %s24, 1
      %p409 = scmp.lt.s32.totalorder %s25, 0
      %s410 = scalar_select %p409, %s25, 0
      %s411 = smul.addr %s408, 2
      %s412 = sadd.s32 %s410, %s411
      %s413 = smul.addr %s412, 8
      %s414 = scalar_lea.vmem %s1, %s413
      %p415 = pneg %p83
      %p416 = pneg %p80
      %p417 = scmp.lt.s32.totalorder %s24, 1
      %s418 = scalar_select %p417, %s24, 1
      %s419 = smul.addr %s418, 2
      %s420 = smul.addr %s419, 8
      %s421 = scalar_lea.vmem %s2, %s420
      %p422 = pneg %p109
      %p423 = pneg %p106
      %p424 = scmp.lt.s32.totalorder %s24, 1
      %s425 = scalar_select %p424, %s24, 1
      %s426 = smul.addr %s425, 2
      %s427 = smul.addr %s426, 8
      %s428 = scalar_lea.vmem %s3, %s427
      %p429 = pneg %p135
      %p430 = pneg %p132
      %p431 = scmp.lt.s32.totalorder %s24, 1
      %s432 = scalar_select %p431, %s24, 1
      %s433 = smul.addr %s432, 2
      %s434 = smul.addr %s433, 8
      %s435 = scalar_lea.vmem %s4, %s434
      %p436 = pneg %p161
      %p437 = pneg %p158
      %p438 = scmp.lt.s32.totalorder %s24, 1
      %s439 = scalar_select %p438, %s24, 1
      %s440 = smul.addr %s439, 2
      %s441 = smul.addr %s440, 8
      %s442 = scalar_lea.vmem %s5, %s441
      %p443 = pneg %p187
      %p444 = pneg %p184
      %p445 = scmp.lt.s32.totalorder %s24, 1
      %s446 = scalar_select %p445, %s24, 1
      %s447 = smul.addr %s446, 2
      %s448 = smul.addr %s447, 8
      %s449 = scalar_lea.vmem %s6, %s448
      %p450 = pneg %p213
      %p451 = pneg %p210
      %p452 = scmp.lt.s32.totalorder %s24, 1
      %s453 = scalar_select %p452, %s24, 1
      %s454 = smul.addr %s453, 2
      %s455 = smul.addr %s454, 8
      %s456 = scalar_lea.vmem %s7, %s455
      %p457 = pneg %p239
      %p458 = pneg %p236
      %p459 = scmp.lt.s32.totalorder %s24, 1
      %s460 = scalar_select %p459, %s24, 1
      %s461 = smul.addr %s460, 2
      %s462 = smul.addr %s461, 8
      %s463 = scalar_lea.vmem %s8, %s462
      %p464 = pneg %p265
      %p465 = pneg %p262
      %p466 = pneg %p293
      %p467 = pneg %p290
      %p468 = scmp.lt.s32.totalorder %s24, 1
      %s469 = scalar_select %p468, %s24, 1
      %p470 = scmp.lt.s32.totalorder %s25, 0
      %s471 = scalar_select %p470, %s25, 0
      %s472 = smul.addr %s469, 2
      %s473 = sadd.s32 %s471, %s472
      %s474 = smul.addr %s473, 8
      %s475 = scalar_lea.vmem %s9, %s474
      %p476 = scmp.lt.s32.totalorder %s24, 1
      %s477 = scalar_select %p476, %s24, 1
      %p478 = scmp.lt.s32.totalorder %s25, 0
      %s479 = scalar_select %p478, %s25, 0
      %s480 = smul.addr %s477, 2
      %s481 = sadd.s32 %s479, %s480
      %s482 = smul.addr %s481, 8
      %s483 = scalar_lea.vmem %s0, %s482
      %p484 = scmp.lt.s32.totalorder %s24, 1
      %s485 = scalar_select %p484, %s24, 1
      %p486 = scmp.lt.s32.totalorder %s25, 0
      %s487 = scalar_select %p486, %s25, 0
      %s488 = smul.addr %s485, 2
      %s489 = sadd.s32 %s487, %s488
      %s490 = smul.addr %s489, 8
      %s491 = scalar_lea.vmem %s1, %s490
      %p492 = scmp.lt.s32.totalorder %s24, 1
      %s493 = scalar_select %p492, %s24, 1
      %s494 = smul.addr %s493, 2
      %s495 = smul.addr %s494, 8
      %s496 = scalar_lea.vmem %s2, %s495
      %p497 = scmp.lt.s32.totalorder %s24, 1
      %s498 = scalar_select %p497, %s24, 1
      %s499 = smul.addr %s498, 2
      %s500 = smul.addr %s499, 8
      %s501 = scalar_lea.vmem %s3, %s500
      %p502 = scmp.lt.s32.totalorder %s24, 1
      %s503 = scalar_select %p502, %s24, 1
      %s504 = smul.addr %s503, 2
      %s505 = smul.addr %s504, 8
      %s506 = scalar_lea.vmem %s4, %s505
      %p507 = scmp.lt.s32.totalorder %s24, 1
      %s508 = scalar_select %p507, %s24, 1
      %s509 = smul.addr %s508, 2
      %s510 = smul.addr %s509, 8
      %s511 = scalar_lea.vmem %s5, %s510
      %p512 = scmp.lt.s32.totalorder %s24, 1
      %s513 = scalar_select %p512, %s24, 1
      %s514 = smul.addr %s513, 2
      %s515 = smul.addr %s514, 8
      %s516 = scalar_lea.vmem %s6, %s515
      %p517 = scmp.lt.s32.totalorder %s24, 1
      %s518 = scalar_select %p517, %s24, 1
      %s519 = smul.addr %s518, 2
      %s520 = smul.addr %s519, 8
      %s521 = scalar_lea.vmem %s7, %s520
      %p522 = scmp.lt.s32.totalorder %s24, 1
      %s523 = scalar_select %p522, %s24, 1
      %s524 = smul.addr %s523, 2
      %s525 = smul.addr %s524, 8
      %s526 = scalar_lea.vmem %s8, %s525
      %p527 = scmp.lt.s32.totalorder %s24, 1
      %s528 = scalar_select %p527, %s24, 1
      %p529 = scmp.lt.s32.totalorder %s25, 0
      %s530 = scalar_select %p529, %s25, 0
      %s531 = smul.addr %s528, 2
      %s532 = sadd.s32 %s530, %s531
      %s533 = smul.addr %s532, 8
      %s534 = scalar_lea.vmem %s9, %s533
      %v536 = vld [vmem:[%s483] sm:$0xff]
      %v537 = vld [vmem:[%s483 + $0x8] sm:$0xff]
      %v538 = vpack.c.bf16 %v537, %v536
      %v539 = vld [vmem:[%s491] sm:$0xff]
      %v540 = vld [vmem:[%s491 + $0x8] sm:$0xff]
      %v541 = vpack.c.bf16 %v540, %v539
      %v542 = vld [vmem:[%s496] sm:$0xff]
      %v543 = vld [vmem:[%s496 + $0x8] sm:$0xff]
      %v544 = vpack.c.bf16 %v543, %v542
      %v545 = vld [vmem:[%s501] sm:$0xff]
      %v546 = vld [vmem:[%s501 + $0x8] sm:$0xff]
      %v547 = vpack.c.bf16 %v546, %v545
      %vm548 = vcmask 130048
      %v550 = vsel %vm548, %v547, 0
      %552 = vmatprep.subr.bf16.mxu0 0
      %553 = vmatpush1.bf16.msra.mxu0 %v541
      %554 = vmatprep.subr.bf16.mxu0 0
      %555 = vmatpush1.bf16.msra.mxu0 0
      %556 = vmatprep.subr.bf16.mxu0 0
      %557 = vmatpush1.bf16.msra.mxu0 0
      %558 = vmatprep.subr.bf16.mxu0 0
      %559 = vmatpush1.bf16.msra.mxu0 0
      %560 = vmatprep.subr.bf16.mxu0 0
      %561 = vmatpush1.bf16.msra.mxu0 0
      %562 = vmatprep.subr.bf16.mxu0 0
      %563 = vmatpush1.bf16.msra.mxu0 0
      %564 = vmatprep.subr.bf16.mxu0 0
      %565 = vmatpush1.bf16.msra.mxu0 0
      %566 = vmatprep.subr.bf16.mxu0 0
      %567 = vmatpush1.bf16.msra.mxu0 0
      %568 = vmatprep.subr.bf16.mxu0 0
      %569 = vmatpush1.bf16.msra.mxu0 0
      %570 = vmatprep.subr.bf16.mxu0 0
      %571 = vmatpush1.bf16.msra.mxu0 0
      %572 = vmatprep.subr.bf16.mxu0 0
      %573 = vmatpush1.bf16.msra.mxu0 0
      %574 = vmatprep.subr.bf16.mxu0 0
      %575 = vmatpush1.bf16.msra.mxu0 0
      %576 = vmatprep.subr.bf16.mxu0 0
      %577 = vmatpush1.bf16.msra.mxu0 0
      %578 = vmatprep.subr.bf16.mxu0 0
      %579 = vmatpush1.bf16.msra.mxu0 0
      %580 = vmatprep.subr.bf16.mxu0 0
      %581 = vmatpush1.bf16.msra.mxu0 0
      %582 = vmatprep.subr.bf16.mxu0 0
      %583 = vmatpush1.bf16.msra.mxu0 0
      %584 = vmatprep.mubr.bf16.mxu0 0
      %585 = vmatmul.mubr.bf16.gmra.mrb[0].mxu0 %v550
      %v586 = vpop.f32.mrb[0].mxu0
      %v587 = vadd.f32 0.0, %v586
      %v588 = vpop.f32.mrb[0].mxu0
      %v589 = vpop.f32.mrb[0].mxu0
      %v590 = vadd.f32 0.0, %v589
      %v591 = vpop.f32.mrb[0].mxu0
      %592 = vdwg.mxu0
      %v594 = vsel %vm548, %v544, 0
      %596 = vmatprep.subr.bf16.mxu0 0
      %597 = vmatpush1.bf16.msra.mxu0 %v538
      %598 = vmatprep.subr.bf16.mxu0 0
      %599 = vmatpush1.bf16.msra.mxu0 0
      %600 = vmatprep.subr.bf16.mxu0 0
      %601 = vmatpush1.bf16.msra.mxu0 0
      %602 = vmatprep.subr.bf16.mxu0 0
      %603 = vmatpush1.bf16.msra.mxu0 0
      %604 = vmatprep.subr.bf16.mxu0 0
      %605 = vmatpush1.bf16.msra.mxu0 0
      %606 = vmatprep.subr.bf16.mxu0 0
      %607 = vmatpush1.bf16.msra.mxu0 0
      %608 = vmatprep.subr.bf16.mxu0 0
      %609 = vmatpush1.bf16.msra.mxu0 0
      %610 = vmatprep.subr.bf16.mxu0 0
      %611 = vmatpush1.bf16.msra.mxu0 0
      %612 = vmatprep.subr.bf16.mxu0 0
      %613 = vmatpush1.bf16.msra.mxu0 0
      %614 = vmatprep.subr.bf16.mxu0 0
      %615 = vmatpush1.bf16.msra.mxu0 0
      %616 = vmatprep.subr.bf16.mxu0 0
      %617 = vmatpush1.bf16.msra.mxu0 0
      %618 = vmatprep.subr.bf16.mxu0 0
      %619 = vmatpush1.bf16.msra.mxu0 0
      %620 = vmatprep.subr.bf16.mxu0 0
      %621 = vmatpush1.bf16.msra.mxu0 0
      %622 = vmatprep.subr.bf16.mxu0 0
      %623 = vmatpush1.bf16.msra.mxu0 0
      %624 = vmatprep.subr.bf16.mxu0 0
      %625 = vmatpush1.bf16.msra.mxu0 0
      %626 = vmatprep.subr.bf16.mxu0 0
      %627 = vmatpush1.bf16.msra.mxu0 0
      %628 = vmatprep.mubr.bf16.mxu0 0
      %629 = vmatmul.mubr.bf16.gmra.mrb[0].mxu0 %v594
      %v630 = vpop.f32.mrb[0].mxu0
      %v631 = vadd.f32 %v587, %v630
      %v632 = vpop.f32.mrb[0].mxu0
      %v633 = vpop.f32.mrb[0].mxu0
      %v634 = vadd.f32 %v590, %v633
      %v635 = vpop.f32.mrb[0].mxu0
      %636 = vdwg.mxu0
      %v637 = vld [vmem:[%s506] sm:$0xff]
      %v638 = vld [vmem:[%s506 + $0x8] sm:$0xff]
      %640 = vset.pattern.permute.xlu0 0
      %641 = vperm.xlu0 %640, %v637
      %v642 = vpop.permute.xlu0 %641
      %645 = vset.pattern.permute.xlu0 0
      %646 = vperm.xlu0 %645, %v638
      %v647 = vpop.permute.xlu0 %646
      %v649 = vadd.f32 %v631, %v642
      %v650 = vadd.f32 %v634, %v647
      %v651 = vadd.f32 %v649, %v650
      %v652 = vrot.slane %v651, 4
      %v653 = vadd.f32 %v651, %v652
      %v654 = vrot.slane %v653, 2
      %v655 = vadd.f32 %v653, %v654
      %v656 = vrot.slane %v655, 1
      %v657 = vadd.f32 %v655, %v656
      %v658 = vrcp.pop 16.0
      %v659 = vmul.f32 %v657, %v658
      %v660 = vsub.f32 %v649, %v659
      %v661 = vsub.f32 %v650, %v659
      %v662 = vmul.f32 %v660, %v660
      %v663 = vmul.f32 %v661, %v661
      %v664 = vadd.f32 %v662, %v663
      %v665 = vrot.slane %v664, 4
      %v666 = vadd.f32 %v664, %v665
      %v667 = vrot.slane %v666, 2
      %v668 = vadd.f32 %v666, %v667
      %v669 = vrot.slane %v668, 1
      %v670 = vadd.f32 %v668, %v669
      %v671 = vmul.f32 %v670, %v658
      %v672 = vadd.f32 %v671, 1e-05
      %v673 = vrsqrt.pop %v672
      %v674 = vmul.f32 %v660, %v673
      %v675 = vmul.f32 %v661, %v673
      %v676 = vld [vmem:[%s511] sm:$0xff]
      %v677 = vld [vmem:[%s511 + $0x8] sm:$0xff]
      %679 = vset.pattern.permute.xlu0 0
      %680 = vperm.xlu0 %679, %v676
      %v681 = vpop.permute.xlu0 %680
      %684 = vset.pattern.permute.xlu0 0
      %685 = vperm.xlu0 %684, %v677
      %v686 = vpop.permute.xlu0 %685
      %v688 = vmul.f32 %v674, %v681
      %v689 = vmul.f32 %v675, %v686
      %v690 = vld [vmem:[%s516] sm:$0xff]
      %v691 = vld [vmem:[%s516 + $0x8] sm:$0xff]
      %693 = vset.pattern.permute.xlu0 0
      %694 = vperm.xlu0 %693, %v690
      %v695 = vpop.permute.xlu0 %694
      %698 = vset.pattern.permute.xlu0 0
      %699 = vperm.xlu0 %698, %v691
      %v700 = vpop.permute.xlu0 %699
      %v702 = vadd.f32 %v688, %v695
      %v703 = vadd.f32 %v689, %v700
      %v704 = vld [vmem:[%s521] sm:$0xff]
      %v705 = vld [vmem:[%s521 + $0x8] sm:$0xf]
      %v706 = vpack.c.bf16 %v705, %v704
      %v707 = vpack.c.bf16 %v703, %v702
      %v708 = vld [vmem:[%s526] sm:$0xff]
      %v709 = vld [vmem:[%s526 + $0x8] sm:$0xf]
      %711 = vset.pattern.permute.xlu0 0
      %712 = vperm.xlu0 %711, %v708
      %v713 = vpop.permute.xlu0 %712
      %716 = vset.pattern.permute.xlu0 0
      %717 = vperm.xlu0 %716, %v709
      %v718 = vpop.permute.xlu0 %717
      %v721 = vsel %vm548, %v706, 0
      %723 = vmatprep.subr.bf16.mxu0 0
      %724 = vmatpush1.bf16.msra.mxu0 %v707
      %725 = vmatprep.subr.bf16.mxu0 0
      %726 = vmatpush1.bf16.msra.mxu0 0
      %727 = vmatprep.subr.bf16.mxu0 0
      %728 = vmatpush1.bf16.msra.mxu0 0
      %729 = vmatprep.subr.bf16.mxu0 0
      %730 = vmatpush1.bf16.msra.mxu0 0
      %731 = vmatprep.subr.bf16.mxu0 0
      %732 = vmatpush1.bf16.msra.mxu0 0
      %733 = vmatprep.subr.bf16.mxu0 0
      %734 = vmatpush1.bf16.msra.mxu0 0
      %735 = vmatprep.subr.bf16.mxu0 0
      %736 = vmatpush1.bf16.msra.mxu0 0
      %737 = vmatprep.subr.bf16.mxu0 0
      %738 = vmatpush1.bf16.msra.mxu0 0
      %739 = vmatprep.subr.bf16.mxu0 0
      %740 = vmatpush1.bf16.msra.mxu0 0
      %741 = vmatprep.subr.bf16.mxu0 0
      %742 = vmatpush1.bf16.msra.mxu0 0
      %743 = vmatprep.subr.bf16.mxu0 0
      %744 = vmatpush1.bf16.msra.mxu0 0
      %745 = vmatprep.subr.bf16.mxu0 0
      %746 = vmatpush1.bf16.msra.mxu0 0
      %747 = vmatprep.subr.bf16.mxu0 0
      %748 = vmatpush1.bf16.msra.mxu0 0
      %749 = vmatprep.subr.bf16.mxu0 0
      %750 = vmatpush1.bf16.msra.mxu0 0
      %751 = vmatprep.subr.bf16.mxu0 0
      %752 = vmatpush1.bf16.msra.mxu0 0
      %753 = vmatprep.subr.bf16.mxu0 0
      %754 = vmatpush1.bf16.msra.mxu0 0
      %755 = vmatprep.mubr.bf16.mxu0 0
      %756 = vmatmul.mubr.bf16.gmra.mrb[0].mxu0 %v721
      %v757 = vpop.f32.mrb[0].mxu0
      %v758 = vadd.f32 %v713, %v757
      %v759 = vpop.f32.mrb[0].mxu0
      %v760 = vpop.f32.mrb[0].mxu0
      %v761 = vadd.f32 %v718, %v760
      %v762 = vpop.f32.mrb[0].mxu0
      %763 = vdwg.mxu0
      %764 = vst [vmem:[%s534] sm:$0xff] %v758
      %765 = vst [vmem:[%s534 + $0x8] sm:$0xf] %v761
      %p766 = scmp.lt.s32.totalorder %s24, 1
      %s767 = scalar_select %p766, %s24, 1
      %p768 = scmp.lt.s32.totalorder %s25, 0
      %s769 = scalar_select %p768, %s25, 0
      %s770 = smul.addr %s767, 2
      %s771 = sadd.s32 %s769, %s770
      %s772 = smul.addr %s771, 8
      %s773 = scalar_lea.vmem %s9, %s772
      // Predicated region
      $region57: #{ocean_decoders_forward.3} parent=55 // pred_check
        %p774 = pneg %p290
      $region58: #{ocean_decoders_forward.3} parent=55 // pred_check_branch
        %776 = sbr.rel (%p774) target = $region60
      $region59: #{ocean_decoders_forward.3} parent=55 // pred_region
        _
      $region60: #{ocean_decoders_forward.3} parent=55 // pred_fallthru
        _
    $region56: #{ocean_decoders_forward.3} parent=5 // pred_fallthru
      _
    %p777 = scmp.le.s32.totalorder 2, %s15
    // Predicated region
    $region61: #{ocean_decoders_forward.3} parent=5 // pred_check
      %p778 = pneg %p777
    $region62: #{ocean_decoders_forward.3} parent=5 // pred_check_branch
      %780 = sbr.rel (%p778) target = $region64
    $region63: #{ocean_decoders_forward.3} parent=5 // pred_region
      %s781 = ssub.s32 %s15, 2
      // Predicated region
      $region65: #{ocean_decoders_forward.3} parent=63 // pred_check
        %p782 = pneg %p296
      $region66: #{ocean_decoders_forward.3} parent=63 // pred_check_branch
        %784 = sbr.rel (%p782) target = $region68
      $region67: #{ocean_decoders_forward.3} parent=63 // pred_region
        %p785 = scmp.lt.s32.totalorder %s26, 1
        %s786 = scalar_select %p785, %s26, 1
        %p787 = scmp.lt.s32.totalorder %s27, 0
        %s788 = scalar_select %p787, %s27, 0
        %s789 = smul.addr %s786, 2
        %s790 = sadd.s32 %s788, %s789
        %s791 = smul.addr %s790, 8
        %s792 = scalar_lea.vmem %s9, %s791
      $region68: #{ocean_decoders_forward.3} parent=63 // pred_fallthru
        _
    $region64: #{ocean_decoders_forward.3} parent=5 // pred_fallthru
      _
  $region6: #{ocean_decoders_forward.3} parent=0 // loop_footer
    %s19 = sadd.s32 1, %s15
  $region7: #{ocean_decoders_forward.3} parent=0 // loop_footer_branch
    %14 = sbr.rel target = $region3
  $region8: #{ocean_decoders_forward.3} parent=0 // loop_exit
    _

// kernel: ocean_decoders_forward.2
$region0: #{ocean_decoders_forward.2}
  #allocation0 [shape = 'u32[]', space=smem, size = 0x4, offset = 0x4, fixed_abs, tag = 'smem constant byte address 0x4 - core index']
  #allocation1 [shape = 'u32[144,128]{1,0:T(1,128)}', space=vmem, size = 0x12000, scoped, tag = 'internal scratch']
  %s0 = inlined_call_operand.vmem [shape: f32[32,32], index: 0, kind: input, shape index: {}]
  %s1 = inlined_call_operand.hbm [shape: f32[2,32,32], index: 1, kind: input, shape index: {}]
  %s2 = inlined_call_operand.vmem [shape: f32[2,1,32], index: 2, kind: input, shape index: {}]
  %s3 = inlined_call_operand.hbm [shape: f32[2,32,64], index: 3, kind: input, shape index: {}]
  %s4 = inlined_call_operand.vmem [shape: f32[2,32,64], index: 4, kind: output, shape index: {}]
  %s5 = sld [smem:[#allocation0]]
  $region57: #{ocean_decoders_forward.2} parent=0
    _
  %s7 = ssub.s32 1, %s5
  %s8 = scalar_select 0, %s7, %s5
  $region1: #{ocean_decoders_forward.2} parent=0
    #allocation2 [shape = 'u8[32768]{0}', space=vmem, size = 0x8000, scoped, tag = 'input window, operand 1']
    #allocation3 [shape = 's32[2]{0}', space=sflag, size = 0x8, scoped, tag = 'scoped memory for ocean_decoders_forward.2']
    #allocation4 [shape = 'u8[32768]{0}', space=vmem, size = 0x8000, scoped, tag = 'input window, operand 3']
    #allocation5 [shape = 's32[2]{0}', space=sflag, size = 0x8, scoped, tag = 'scoped memory for ocean_decoders_forward.2']
    %9 = vsyncpa [#allocation3], 0
    %s10 = scalar_lea.sflag [#allocation3], 1
    %11 = vsyncpa %s10, 0
    %12 = vsyncpa [#allocation5], 0
    %s13 = scalar_lea.sflag [#allocation5], 1
    %14 = vsyncpa %s13, 0
    loop: start=0, step=1, limit=4
    $region2: #{ocean_decoders_forward.2} parent=1 // loop_pre_header
      _
    $region3: #{ocean_decoders_forward.2} parent=1 // loop_header
      %s16 = sphi 0, %s20
      %p17 = scmp.ge.s32.totalorder %s16, 4
      %s23 = sphi 0, %s35
      %s24 = sphi 0, %s31
      %s25 = sphi 0, %s23
      %s26 = sphi 0, %s24
      %s27 = sphi 0, %s25
      %s28 = sphi 0, %s26
      %s38 = sphi 0, %s40
      %s41 = sphi 0, %s38
      %s42 = sphi 0, %s41
      %s58 = sphi 0, %s42
      %s64 = sphi 0, %s66
      %s67 = sphi 0, %s64
      %s68 = sphi 0, %s67
      %s84 = sphi 0, %s68
      %s90 = sphi 0, %s92
      %s93 = sphi 0, %s90
      %s94 = sphi 0, %s93
      %s110 = sphi 0, %s94
      %s116 = sphi 0, %s118
      %s119 = sphi 0, %s116
      %s120 = sphi 0, %s119
      %s136 = sphi 0, %s120
      %s144 = sphi 0, %s146
      %s147 = sphi 0, %s144
      %s148 = sphi 0, %s147
      %s164 = sphi 0, %s148
    $region4: #{ocean_decoders_forward.2} parent=1 // loop_header_branch
      %19 = sbr.rel (%p17) target = $region8
    $region5: #{ocean_decoders_forward.2} parent=1 // loop_body
      %s21 = ssub.s32 %s16, 1
      %s22 = ssub.s32 %s16, 2
      %s29 = sadd.s32 1, %s24
      %p30 = scmp.ge.s32.totalorder %s29, 1
      %s31 = scalar_select %p30, 0, %s29
      %s32 = sadd.s32 1, %s23
      %s33 = scalar_select %p30, %s32, %s23
      %p34 = scmp.ge.s32.totalorder %s33, 2
      %s35 = scalar_select %p34, 0, %s33
      %s36 = ssub.s32 %s24, %s31
      %p37 = scmp.eq.s32.totalorder %s36, 0
      %s39 = sadd.s32 %s38, 1
      %s40 = scalar_select %p37, %s38, %s39
      %p43 = pneg %p37
      %p44 = scmp.eq.s32.totalorder %s16, 1
      %p45 = por %p43, %p44
      %p46 = scmp.ne.s32.totalorder %s38, %s41
      %p47 = scmp.eq.s32.totalorder %s16, 0
      %p48 = por %p46, %p47
      %p49 = scmp.ne.s32.totalorder %s38, %s41
      %p50 = scmp.eq.s32.totalorder %s21, 1
      %p51 = por %p49, %p50
      %p52 = scmp.ne.s32.totalorder %s41, %s42
      %p53 = scmp.eq.s32.totalorder %s21, 0
      %p54 = por %p52, %p53
      %p55 = scmp.ne.s32.totalorder %s41, %s42
      %p56 = scmp.eq.s32.totalorder %s22, 1
      %p57 = por %p55, %p56
      %p59 = scmp.ne.s32.totalorder %s42, %s58
      %p60 = scmp.eq.s32.totalorder %s22, 0
      %p61 = por %p59, %p60
      %s62 = ssub.s32 %s23, %s35
      %p63 = scmp.eq.s32.totalorder %s62, 0
      %s65 = sadd.s32 %s64, 1
      %s66 = scalar_select %p63, %s64, %s65
      %p69 = pneg %p63
      %p70 = scmp.eq.s32.totalorder %s16, 1
      %p71 = por %p69, %p70
      %p72 = scmp.ne.s32.totalorder %s64, %s67
      %p73 = scmp.eq.s32.totalorder %s16, 0
      %p74 = por %p72, %p73
      %p75 = scmp.ne.s32.totalorder %s64, %s67
      %p76 = scmp.eq.s32.totalorder %s21, 1
      %p77 = por %p75, %p76
      %p78 = scmp.ne.s32.totalorder %s67, %s68
      %p79 = scmp.eq.s32.totalorder %s21, 0
      %p80 = por %p78, %p79
      %p81 = scmp.ne.s32.totalorder %s67, %s68
      %p82 = scmp.eq.s32.totalorder %s22, 1
      %p83 = por %p81, %p82
      %p85 = scmp.ne.s32.totalorder %s68, %s84
      %p86 = scmp.eq.s32.totalorder %s22, 0
      %p87 = por %p85, %p86
      %s88 = ssub.s32 %s23, %s35
      %p89 = scmp.eq.s32.totalorder %s88, 0
      %s91 = sadd.s32 %s90, 1
      %s92 = scalar_select %p89, %s90, %s91
      %p95 = pneg %p89
      %p96 = scmp.eq.s32.totalorder %s16, 1
      %p97 = por %p95, %p96
      %p98 = scmp.ne.s32.totalorder %s90, %s93
      %p99 = scmp.eq.s32.totalorder %s16, 0
      %p100 = por %p98, %p99
      %p101 = scmp.ne.s32.totalorder %s90, %s93
      %p102 = scmp.eq.s32.totalorder %s21, 1
      %p103 = por %p101, %p102
      %p104 = scmp.ne.s32.totalorder %s93, %s94
      %p105 = scmp.eq.s32.totalorder %s21, 0
      %p106 = por %p104, %p105
      %p107 = scmp.ne.s32.totalorder %s93, %s94
      %p108 = scmp.eq.s32.totalorder %s22, 1
      %p109 = por %p107, %p108
      %p111 = scmp.ne.s32.totalorder %s94, %s110
      %p112 = scmp.eq.s32.totalorder %s22, 0
      %p113 = por %p111, %p112
      %s114 = ssub.s32 %s23, %s35
      %p115 = scmp.eq.s32.totalorder %s114, 0
      %s117 = sadd.s32 %s116, 1
      %s118 = scalar_select %p115, %s116, %s117
      %p121 = pneg %p115
      %p122 = scmp.eq.s32.totalorder %s16, 1
      %p123 = por %p121, %p122
      %p124 = scmp.ne.s32.totalorder %s116, %s119
      %p125 = scmp.eq.s32.totalorder %s16, 0
      %p126 = por %p124, %p125
      %p127 = scmp.ne.s32.totalorder %s116, %s119
      %p128 = scmp.eq.s32.totalorder %s21, 1
      %p129 = por %p127, %p128
      %p130 = scmp.ne.s32.totalorder %s119, %s120
      %p131 = scmp.eq.s32.totalorder %s21, 0
      %p132 = por %p130, %p131
      %p133 = scmp.ne.s32.totalorder %s119, %s120
      %p134 = scmp.eq.s32.totalorder %s22, 1
      %p135 = por %p133, %p134
      %p137 = scmp.ne.s32.totalorder %s120, %s136
      %p138 = scmp.eq.s32.totalorder %s22, 0
      %p139 = por %p137, %p138
      %s140 = ssub.s32 %s23, %s35
      %s141 = ssub.s32 %s24, %s31
      %s142 = sor.u32 %s140, %s141
      %p143 = scmp.eq.s32.totalorder %s142, 0
      %s145 = sadd.s32 %s144, 1
      %s146 = scalar_select %p143, %s144, %s145
      %p149 = pneg %p143
      %p150 = scmp.eq.s32.totalorder %s16, 1
      %p151 = por %p149, %p150
      %p152 = scmp.ne.s32.totalorder %s144, %s147
      %p153 = scmp.eq.s32.totalorder %s16, 0
      %p154 = por %p152, %p153
      %p155 = scmp.ne.s32.totalorder %s144, %s147
      %p156 = scmp.eq.s32.totalorder %s21, 1
      %p157 = por %p155, %p156
      %p158 = scmp.ne.s32.totalorder %s147, %s148
      %p159 = scmp.eq.s32.totalorder %s21, 0
      %p160 = por %p158, %p159
      %p161 = scmp.ne.s32.totalorder %s147, %s148
      %p162 = scmp.eq.s32.totalorder %s22, 1
      %p163 = por %p161, %p162
      %p165 = scmp.ne.s32.totalorder %s148, %s164
      %p166 = scmp.eq.s32.totalorder %s22, 0
      %p167 = por %p165, %p166
      %p168 = scmp.le.s32.totalorder 1, %s16
      %p169 = scmp.lt.s32.totalorder %s16, 3
      %p170 = pnand %p168, %p169
      %p171 = pneg %p170
      // Predicated region
      $region9: #{ocean_decoders_forward.2} parent=5 // pred_check
        _
      $region10: #{ocean_decoders_forward.2} parent=5 // pred_check_branch
        %173 = sbr.rel (%p170) target = $region12
      $region11: #{ocean_decoders_forward.2} parent=5 // pred_region
        %s174 = ssub.s32 %s16, 1
        // Predicated region
        $region13: #{ocean_decoders_forward.2} parent=11 // pred_check
          %p175 = pneg %p54
        $region14: #{ocean_decoders_forward.2} parent=11 // pred_check_branch
          %177 = sbr.rel (%p175) target = $region16
        $region15: #{ocean_decoders_forward.2} parent=11 // pred_region
          %s178 = smul.u32 4, %s26
          %p179 = scmp.lt.s32.totalorder %s178, 3
          %s180 = scalar_select %p179, %s178, 3
          %s181 = smul.addr %s180, 8
          %s182 = scalar_lea.vmem %s0, %s181
          %s183 = smul.u32 4, %s26
        $region16: #{ocean_decoders_forward.2} parent=11 // pred_fallthru
          _
      $region12: #{ocean_decoders_forward.2} parent=5 // pred_fallthru
        _
      %p184 = scmp.lt.s32.totalorder %s16, 2
      // Predicated region
      $region17: #{ocean_decoders_forward.2} parent=5 // pred_check
        %p185 = pneg %p184
      $region18: #{ocean_decoders_forward.2} parent=5 // pred_check_branch
        %187 = sbr.rel (%p185) target = $region20
      $region19: #{ocean_decoders_forward.2} parent=5 // pred_region
        // Predicated region
        $region21: #{ocean_decoders_forward.2} parent=19 // pred_check
          %p188 = pneg %p74
        $region22: #{ocean_decoders_forward.2} parent=19 // pred_check_branch
          %190 = sbr.rel (%p188) target = $region24
        $region23: #{ocean_decoders_forward.2} parent=19 // pred_region
          %s191 = sand.u32 %s64, 1
          %s192 = scalar_lea.sflag [#allocation3], %s191
          %s193 = sand.u32 %s64, 1
          %s194 = smul.addr %s193, 32
          %s195 = scalar_lea.vmem [#allocation2], %s194
          %s197 = ssub.s32 512, 512
          %198 = vsyncadd %s192, %s197
          %s199 = smul.addr %s23, 4
          %s200 = smul.addr %s199, 128
          %s201 = scalar_lea.hbm %s1, %s200
          %s202 = sshll.u32 %s195, 4
          %s203 = int_to_ptr.vmem [resolvable:$true] %s202
          %208 = dma.hbm_to_vmem [thread:$0]  %s201, 512, %s203, %s192, 128, 128, 8
        $region24: #{ocean_decoders_forward.2} parent=19 // pred_fallthru
          _
        // Predicated region
        $region25: #{ocean_decoders_forward.2} parent=19 // pred_check
          %p209 = pneg %p100
        $region26: #{ocean_decoders_forward.2} parent=19 // pred_check_branch
          %211 = sbr.rel (%p209) target = $region28
        $region27: #{ocean_decoders_forward.2} parent=19 // pred_region
          %p212 = scmp.lt.s32.totalorder %s23, 1
          %s213 = scalar_select %p212, %s23, 1
          %s214 = scalar_lea.vmem %s2, %s213
        $region28: #{ocean_decoders_forward.2} parent=19 // pred_fallthru
          _
        // Predicated region
        $region29: #{ocean_decoders_forward.2} parent=19 // pred_check
          %p215 = pneg %p126
        $region30: #{ocean_decoders_forward.2} parent=19 // pred_check_branch
          %217 = sbr.rel (%p215) target = $region32
        $region31: #{ocean_decoders_forward.2} parent=19 // pred_region
          %s218 = sand.u32 %s116, 1
          %s219 = scalar_lea.sflag [#allocation5], %s218
          %s220 = sand.u32 %s116, 1
          %s221 = smul.addr %s220, 32
          %s222 = scalar_lea.vmem [#allocation4], %s221
          %s224 = ssub.s32 512, 512
          %225 = vsyncadd %s219, %s224
          %s226 = smul.addr %s23, 4
          %s227 = smul.addr %s226, 128
          %s228 = scalar_lea.hbm %s3, %s227
          %s229 = sshll.u32 %s222, 4
          %s230 = int_to_ptr.vmem [resolvable:$true] %s229
          %235 = dma.hbm_to_vmem [thread:$0]  %s228, 512, %s230, %s219, 128, 128, 8
        $region32: #{ocean_decoders_forward.2} parent=19 // pred_fallthru
          _
      $region20: #{ocean_decoders_forward.2} parent=5 // pred_fallthru
        _
      %p236 = scmp.le.s32.totalorder 1, %s16
      %p237 = scmp.lt.s32.totalorder %s16, 3
      %p238 = pnand %p236, %p237
      %p239 = pneg %p238
      // Predicated region
      $region33: #{ocean_decoders_forward.2} parent=5 // pred_check
        _
      $region34: #{ocean_decoders_forward.2} parent=5 // pred_check_branch
        %241 = sbr.rel (%p238) target = $region36
      $region35: #{ocean_decoders_forward.2} parent=5 // pred_region
        %s242 = ssub.s32 %s16, 1
        %s243 = sand.u32 %s67, 1
        %s244 = scalar_lea.sflag [#allocation3], %s243
        %s245 = sand.u32 %s67, 1
        %s246 = smul.addr %s245, 32
        %s247 = scalar_lea.vmem [#allocation2], %s246
        // Predicated region
        $region37: #{ocean_decoders_forward.2} parent=35 // pred_check
          %p248 = pneg %p80
        $region38: #{ocean_decoders_forward.2} parent=35 // pred_check_branch
          %250 = sbr.rel (%p248) target = $region40
        $region39: #{ocean_decoders_forward.2} parent=35 // pred_region
          %251 = dma.done %s244, 512
        $region40: #{ocean_decoders_forward.2} parent=35 // pred_fallthru
          _
        %s252 = sand.u32 %s119, 1
        %s253 = scalar_lea.sflag [#allocation5], %s252
        %s254 = sand.u32 %s119, 1
        %s255 = smul.addr %s254, 32
        %s256 = scalar_lea.vmem [#allocation4], %s255
        // Predicated region
        $region41: #{ocean_decoders_forward.2} parent=35 // pred_check
          %p257 = pneg %p132
        $region42: #{ocean_decoders_forward.2} parent=35 // pred_check_branch
          %259 = sbr.rel (%p257) target = $region44
        $region43: #{ocean_decoders_forward.2} parent=35 // pred_region
          %260 = dma.done %s253, 512
        $region44: #{ocean_decoders_forward.2} parent=35 // pred_fallthru
          _
        %s261 = smul.u32 4, %s26
        %p262 = scmp.lt.s32.totalorder %s261, 3
        %s263 = scalar_select %p262, %s261, 3
        %s264 = smul.addr %s263, 8
        %s265 = scalar_lea.vmem %s0, %s264
        %p266 = pneg %p54
        %p267 = pneg %p51
        %s268 = sand.u32 %s67, 1
        %s269 = scalar_lea.sflag [#allocation3], %s268
        %s270 = sand.u32 %s67, 1
        %s271 = smul.addr %s270, 32
        %s272 = scalar_lea.vmem [#allocation2], %s271
        %p273 = pneg %p80
        %p274 = pneg %p77
        %p275 = scmp.lt.s32.totalorder %s25, 1
        %s276 = scalar_select %p275, %s25, 1
        %s277 = scalar_lea.vmem %s2, %s276
        %p278 = pneg %p106
        %p279 = pneg %p103
        %s280 = sand.u32 %s119, 1
        %s281 = scalar_lea.sflag [#allocation5], %s280
        %s282 = sand.u32 %s119, 1
        %s283 = smul.addr %s282, 32
        %s284 = scalar_lea.vmem [#allocation4], %s283
        %p285 = pneg %p132
        %p286 = pneg %p129
        %p287 = pneg %p160
        %p288 = pneg %p157
        %s289 = smul.u32 4, %s26
        %p290 = scmp.lt.s32.totalorder %s25, 1
        %s291 = scalar_select %p290, %s25, 1
        %p292 = scmp.lt.s32.totalorder %s289, 3
        %s293 = scalar_select %p292, %s289, 3
        %s294 = smul.addr %s291, 4
        %s295 = sadd.s32 %s293, %s294
        %s296 = smul.addr %s295, 8
        %s297 = scalar_lea.vmem %s4, %s296
        %s298 = smul.u32 4, %s26
        %p299 = scmp.lt.s32.totalorder %s298, 3
        %s300 = scalar_select %p299, %s298, 3
        %s301 = smul.addr %s300, 8
        %s302 = scalar_lea.vmem %s0, %s301
        %s303 = smul.u32 4, %s26
        %p304 = scmp.lt.s32.totalorder %s25, 1
        %s305 = scalar_select %p304, %s25, 1
        %s306 = scalar_lea.vmem %s2, %s305
        %s307 = smul.u32 4, %s26
        %p308 = scmp.lt.s32.totalorder %s25, 1
        %s309 = scalar_select %p308, %s25, 1
        %p310 = scmp.lt.s32.totalorder %s307, 3
        %s311 = scalar_select %p310, %s307, 3
        %s312 = smul.addr %s309, 4
        %s313 = sadd.s32 %s311, %s312
        %s314 = smul.addr %s313, 8
        %s315 = scalar_lea.vmem %s4, %s314
        %s316 = smul.u32 4, %s26
        %v318 = vld [vmem:[%s302] sm:$0xff]
        %v319 = vld [vmem:[%s302 + $0x8] sm:$0xff]
        %v320 = vld [vmem:[%s302 + $0x10] sm:$0xff]
        %v321 = vld [vmem:[%s302 + $0x18] sm:$0xff]
        %v322 = vpack.c.bf16 %v319, %v318
        %v323 = vpack.c.bf16 %v321, %v320
        %v324 = vld [vmem:[%s247] sm:$0xff]
        %v325 = vld [vmem:[%s247 + $0x8] sm:$0xff]
        %v326 = vld [vmem:[%s247 + $0x10] sm:$0xff]
        %v327 = vld [vmem:[%s247 + $0x18] sm:$0xff]
        %v328 = vpack.c.bf16 %v325, %v324
        %v329 = vpack.c.bf16 %v327, %v326
        %v330 = vld [vmem:[%s306] sm:$0x1]
        %v332 = vlaneseq
        %v333 = vshrl.u32 %v332, 7
        %v334 = vsub.s32 0, %v333
        %v335 = vrot.slane %v330, %v334
        %vm337 = vcmask 261120
        %v339 = vsel %vm337, %v322, 0
        %v342 = vsel %vm337, %v323, 0
        %344 = vmatprep.subr.bf16.mxu0 0
        %345 = vmatpush1.bf16.msra.mxu0 %v328
        %346 = vmatprep.subr.bf16.mxu0 0
        %347 = vmatpush1.bf16.msra.mxu0 %v329
        %348 = vmatprep.subr.bf16.mxu0 0
        %349 = vmatpush1.bf16.msra.mxu0 0
        %350 = vmatprep.subr.bf16.mxu0 0
        %351 = vmatpush1.bf16.msra.mxu0 0
        %352 = vmatprep.subr.bf16.mxu0 0
        %353 = vmatpush1.bf16.msra.mxu0 0
        %354 = vmatprep.subr.bf16.mxu0 0
        %355 = vmatpush1.bf16.msra.mxu0 0
        %356 = vmatprep.subr.bf16.mxu0 0
        %357 = vmatpush1.bf16.msra.mxu0 0
        %358 = vmatprep.subr.bf16.mxu0 0
        %359 = vmatpush1.bf16.msra.mxu0 0
        %360 = vmatprep.subr.bf16.mxu0 0
        %361 = vmatpush1.bf16.msra.mxu0 0
        %362 = vmatprep.subr.bf16.mxu0 0
        %363 = vmatpush1.bf16.msra.mxu0 0
        %364 = vmatprep.subr.bf16.mxu0 0
        %365 = vmatpush1.bf16.msra.mxu0 0
        %366 = vmatprep.subr.bf16.mxu0 0
        %367 = vmatpush1.bf16.msra.mxu0 0
        %368 = vmatprep.subr.bf16.mxu0 0
        %369 = vmatpush1.bf16.msra.mxu0 0
        %370 = vmatprep.subr.bf16.mxu0 0
        %371 = vmatpush1.bf16.msra.mxu0 0
        %372 = vmatprep.subr.bf16.mxu0 0
        %373 = vmatpush1.bf16.msra.mxu0 0
        %374 = vmatprep.subr.bf16.mxu0 0
        %375 = vmatpush1.bf16.msra.mxu0 0
        %376 = vmatprep.mubr.bf16.mxu0 0
        %377 = vmatmul.mubr.bf16.gmra.mrb[0].mxu0 %v339
        %v378 = vpop.f32.mrb[0].mxu0
        %v379 = vadd.f32 %v335, %v378
        %v380 = vpop.f32.mrb[0].mxu0
        %v381 = vpop.f32.mrb[0].mxu0
        %v382 = vadd.f32 %v335, %v381
        %v383 = vpop.f32.mrb[0].mxu0
        %384 = vmatprep.mubr.bf16.mxu0 0
        %385 = vmatmul.mubr.bf16.gmra.mrb[0].mxu0 %v342
        %v386 = vpop.f32.mrb[0].mxu0
        %v387 = vadd.f32 %v335, %v386
        %v388 = vpop.f32.mrb[0].mxu0
        %v389 = vpop.f32.mrb[0].mxu0
        %v390 = vadd.f32 %v335, %v389
        %v391 = vpop.f32.mrb[0].mxu0
        %392 = vdwg.mxu0
        %v393 = vpack.c.bf16 %v382, %v379
        %v394 = vpack.c.bf16 %v390, %v387
        %v395 = vld [vmem:[%s256] sm:$0xff]
        %v396 = vld [vmem:[%s256 + $0x8] sm:$0xff]
        %v397 = vld [vmem:[%s256 + $0x10] sm:$0xff]
        %v398 = vld [vmem:[%s256 + $0x18] sm:$0xff]
        %v399 = vpack.c.bf16 %v396, %v395
        %v400 = vpack.c.bf16 %v398, %v397
        %v402 = vsel %vm337, %v393, 0
        %v405 = vsel %vm337, %v394, 0
        %407 = vmatprep.subr.bf16.mxu0 0
        %408 = vmatpush1.bf16.msra.mxu0 %v399
        %409 = vmatprep.subr.bf16.mxu0 0
        %410 = vmatpush1.bf16.msra.mxu0 %v400
        %411 = vmatprep.subr.bf16.mxu0 0
        %412 = vmatpush1.bf16.msra.mxu0 0
        %413 = vmatprep.subr.bf16.mxu0 0
        %414 = vmatpush1.bf16.msra.mxu0 0
        %415 = vmatprep.subr.bf16.mxu0 0
        %416 = vmatpush1.bf16.msra.mxu0 0
        %417 = vmatprep.subr.bf16.mxu0 0
        %418 = vmatpush1.bf16.msra.mxu0 0
        %419 = vmatprep.subr.bf16.mxu0 0
        %420 = vmatpush1.bf16.msra.mxu0 0
        %421 = vmatprep.subr.bf16.mxu0 0
        %422 = vmatpush1.bf16.msra.mxu0 0
        %423 = vmatprep.subr.bf16.mxu0 0
        %424 = vmatpush1.bf16.msra.mxu0 0
        %425 = vmatprep.subr.bf16.mxu0 0
        %426 = vmatpush1.bf16.msra.mxu0 0
        %427 = vmatprep.subr.bf16.mxu0 0
        %428 = vmatpush1.bf16.msra.mxu0 0
        %429 = vmatprep.subr.bf16.mxu0 0
        %430 = vmatpush1.bf16.msra.mxu0 0
        %431 = vmatprep.subr.bf16.mxu0 0
        %432 = vmatpush1.bf16.msra.mxu0 0
        %433 = vmatprep.subr.bf16.mxu0 0
        %434 = vmatpush1.bf16.msra.mxu0 0
        %435 = vmatprep.subr.bf16.mxu0 0
        %436 = vmatpush1.bf16.msra.mxu0 0
        %437 = vmatprep.subr.bf16.mxu0 0
        %438 = vmatpush1.bf16.msra.mxu0 0
        %439 = vmatprep.mubr.bf16.mxu0 0
        %440 = vmatmul.mubr.bf16.gmra.mrb[0].mxu0 %v402
        %v441 = vpop.f32.mrb[0].mxu0
        %v442 = vadd.f32 0.0, %v441
        %v443 = vpop.f32.mrb[0].mxu0
        %v444 = vpop.f32.mrb[0].mxu0
        %v445 = vadd.f32 0.0, %v444
        %v446 = vpop.f32.mrb[0].mxu0
        %447 = vmatprep.mubr.bf16.mxu0 0
        %448 = vmatmul.mubr.bf16.gmra.mrb[0].mxu0 %v405
        %v449 = vpop.f32.mrb[0].mxu0
        %v450 = vadd.f32 0.0, %v449
        %v451 = vpop.f32.mrb[0].mxu0
        %v452 = vpop.f32.mrb[0].mxu0
        %v453 = vadd.f32 0.0, %v452
        %v454 = vpop.f32.mrb[0].mxu0
        %455 = vdwg.mxu0
        %vm456 = vcmask 523264
        %457 = vst.msk [vmem:[%s315] sm:$0xff] %vm456, %v442
        %458 = vst.msk [vmem:[%s315 + $0x8] sm:$0xff] %vm456, %v445
        %459 = vst.msk [vmem:[%s315 + $0x10] sm:$0xff] %vm456, %v450
        %460 = vst.msk [vmem:[%s315 + $0x18] sm:$0xff] %vm456, %v453
        %s461 = smul.u32 4, %s26
        %p462 = scmp.lt.s32.totalorder %s25, 1
        %s463 = scalar_select %p462, %s25, 1
        %p464 = scmp.lt.s32.totalorder %s461, 3
        %s465 = scalar_select %p464, %s461, 3
        %s466 = smul.addr %s463, 4
        %s467 = sadd.s32 %s465, %s466
        %s468 = smul.addr %s467, 8
        %s469 = scalar_lea.vmem %s4, %s468
        // Predicated region
        $region45: #{ocean_decoders_forward.2} parent=35 // pred_check
          %p470 = pneg %p157
        $region46: #{ocean_decoders_forward.2} parent=35 // pred_check_branch
          %472 = sbr.rel (%p470) target = $region48
        $region47: #{ocean_decoders_forward.2} parent=35 // pred_region
          %s473 = smul.u32 4, %s26
        $region48: #{ocean_decoders_forward.2} parent=35 // pred_fallthru
          _
      $region36: #{ocean_decoders_forward.2} parent=5 // pred_fallthru
        _
      %p474 = scmp.le.s32.totalorder 2, %s16
      // Predicated region
      $region49: #{ocean_decoders_forward.2} parent=5 // pred_check
        %p475 = pneg %p474
      $region50: #{ocean_decoders_forward.2} parent=5 // pred_check_branch
        %477 = sbr.rel (%p475) target = $region52
      $region51: #{ocean_decoders_forward.2} parent=5 // pred_region
        %s478 = ssub.s32 %s16, 2
        // Predicated region
        $region53: #{ocean_decoders_forward.2} parent=51 // pred_check
          %p479 = pneg %p163
        $region54: #{ocean_decoders_forward.2} parent=51 // pred_check_branch
          %481 = sbr.rel (%p479) target = $region56
        $region55: #{ocean_decoders_forward.2} parent=51 // pred_region
          %s482 = smul.u32 4, %s28
          %p483 = scmp.lt.s32.totalorder %s27, 1
          %s484 = scalar_select %p483, %s27, 1
          %p485 = scmp.lt.s32.totalorder %s482, 3
          %s486 = scalar_select %p485, %s482, 3
          %s487 = smul.addr %s484, 4
          %s488 = sadd.s32 %s486, %s487
          %s489 = smul.addr %s488, 8
          %s490 = scalar_lea.vmem %s4, %s489
        $region56: #{ocean_decoders_forward.2} parent=51 // pred_fallthru
          _
      $region52: #{ocean_decoders_forward.2} parent=5 // pred_fallthru
        _
    $region6: #{ocean_decoders_forward.2} parent=1 // loop_footer
      %s20 = sadd.s32 1, %s16
    $region7: #{ocean_decoders_forward.2} parent=1 // loop_footer_branch
      %15 = sbr.rel target = $region3
    $region8: #{ocean_decoders_forward.2} parent=1 // loop_exit
      _
    %491 = vsyncpa [#allocation3], 1
    %s492 = scalar_lea.sflag [#allocation3], 1
    %493 = vsyncpa %s492, 1
    %494 = vsyncpa [#allocation5], 1
    %s495 = scalar_lea.sflag [#allocation5], 1
    %496 = vsyncpa %s495, 1

</llo_original>
